<compile_context>
chip_gen: v7x
topology: tpu7x:2x2x1
jax: 0.10.0
libtpu: 0.0.40
codegen_flags: <defaults>
</compile_context>

<pallas_src>
import numpy as np
import jax
import jax.numpy as jnp
from jax.experimental import pallas as pl
from jax.experimental.pallas import tpu as pltpu

# The module's hard-coded MaxPool1d(99) / BatchNorm1d(114) force these sizes.
EMB_DIM = 100   # conv "length":  emb_dim - kernel + 1 == 99 -> maxpool(99) -> 1
SEQ_LEN = 100   # conv "channels": must equal Conv1d in_channels == emb_dim


def _round_up(x, m):
    return ((x + m - 1) // m) * m


def meta_kernel(emb_ref, w0_ref, w1_ref, cb_ref, wfc_ref, bfc_ref,
                wo_ref, bo_ref, out_ref, feat_ref):
    TB = emb_ref.shape[0]
    D = emb_ref.shape[2]            # conv "length" (== emb_dim)
    lout = D - 1                    # Conv1d(kernel_size=2) output length (99)
    dn = (((0,), (0,)), ((), ()))   # contract the (2*S) seq/channel axis of the lhs

    w0 = w0_ref[...]                # (2S, NF) bf16, block-diag [context | AST], tap 0
    w1 = w1_ref[...]                # (2S, NF) bf16, tap 1
    cb = cb_ref[...]                # (1, NF)  f32, conv bias [bC | bA | 0...]

    # Per-sample conv branches (statically unrolled over the batch tile).
    for b in range(TB):
        e2 = emb_ref[b]             # (2S, D) bf16: [context ; AST] embeddings
        r0 = jax.lax.dot_general(e2, w0, dn, preferred_element_type=jnp.float32)
        r1 = jax.lax.dot_general(e2, w1, dn, preferred_element_type=jnp.float32)
        c = r0[:lout, :] + r1[1:, :] + cb                        # (99, NF)
        # ReLU + MaxPool1d(99, 1) + Flatten -> one 128-lane feature row.
        feat_ref[pl.ds(b, 1), :] = jnp.max(jnp.maximum(c, 0.0), axis=0, keepdims=True)

    # Fused head on the whole tile (BatchNorm already folded into wfc/bfc; Dropout
    # is identity in eval mode).
    x = feat_ref[...]                                            # (TB, NF) f32
    h = jnp.maximum(
        jnp.dot(x, wfc_ref[...], precision=jax.lax.Precision.HIGHEST,
                preferred_element_type=jnp.float32) + bfc_ref[...], 0.0)
    z = jnp.dot(h, wo_ref[...], precision=jax.lax.Precision.HIGHEST,
                preferred_element_type=jnp.float32) + bo_ref[...]
    out_ref[...] = 1.0 / (1.0 + jnp.exp(-z))                     # merged sigmoid heads


def meta_model_forward(x_C, x_A, params, *, tb=32):
    """Eval-mode forward. Returns (y_d, y_b) like MetaModel.forward."""
    B, S = x_C.shape
    vC, D = params["embC"].shape
    # Hard-coded MaxPool1d(99) / BatchNorm1d(114) require seq_len == emb_dim == 100.
    assert S == D == 100, "MetaModel requires seq_len == emb_dim == 100"
    assert x_A.shape == (B, S)

    OC = params["wC"].shape[0]          # 64 context conv channels
    OA = params["wA"].shape[0]          # 50 AST conv channels
    H = params["Wfc"].shape[0]          # 50 hidden units
    nd = params["Wd"].shape[0]
    nb = params["Wb"].shape[0]
    NF = _round_up(OC + OA, 128)        # feature lanes (114 -> 128)
    NH = _round_up(H, 128)              # hidden lanes  (50  -> 128)
    NO = _round_up(nd + nb, 128)        # output lanes  (nd+nb -> 128), lane-dense store
    f32 = jnp.float32
    hp = jax.lax.Precision.HIGHEST

    # --- conv weights: per-tap, block-diagonal over the two branches, bf16 ---
    def tap(t):
        w = jnp.zeros((2 * S, NF), f32)
        w = w.at[:S, :OC].set(params["wC"][:, :, t].T)
        w = w.at[S:, OC:OC + OA].set(params["wA"][:, :, t].T)
        return w.astype(jnp.bfloat16)
    w0, w1 = tap(0), tap(1)
    cb = (jnp.zeros((1, NF), f32)
          .at[0, :OC].set(params["bC"])
          .at[0, OC:OC + OA].set(params["bA"]))

    # --- BatchNorm1d(114, affine=False, eval) folded into Linear(114, 50) ---
    inv = 1.0 / jnp.sqrt(params["bn_var"] + 1e-5)
    wfc_t = params["Wfc"].T                                      # (114, H)
    wfc = jnp.zeros((NF, NH), f32).at[:OC + OA, :H].set(wfc_t * inv[:, None])
    bfc = jnp.zeros((1, NH), f32).at[0, :H].set(
        params["bfc"] - jnp.dot(params["bn_mean"] * inv, wfc_t, precision=hp))

    # --- merged D/B heads, padded to a lane-dense output ---
    wo = (jnp.zeros((NH, NO), f32)
          .at[:H, :nd].set(params["Wd"].T)
          .at[:H, nd:nd + nb].set(params["Wb"].T))
    bo = (jnp.zeros((1, NO), f32)
          .at[0, :nd].set(params["bd"])
          .at[0, nd:nd + nb].set(params["bb"]))

    # --- one fused embedding gather, (B, 2S, D) layout (no transpose), bf16 ---
    emb_all = jnp.concatenate([params["embC"], params["embA"]], axis=0).astype(jnp.bfloat16)
    idx = jnp.concatenate([x_C, x_A + vC], axis=1)               # (B, 2S)

    # Batch tile: TB samples per grid step (multiple of 8, or the whole batch).
    # For v7x, pick tb so that Bpad // TB >= 2 (both TensorCores get work).
    if B <= tb:
        TB, Bpad = B, B
    else:
        TB = max(8, (tb // 8) * 8)
        Bpad = _round_up(B, TB)
    if Bpad != B:
        idx = jnp.pad(idx, ((0, Bpad - B), (0, 0)))
    e2 = jnp.take(emb_all, idx, axis=0)                          # (Bpad, 2S, D) bf16

    grid_spec = pltpu.PrefetchScalarGridSpec(
        num_scalar_prefetch=0,
        grid=(Bpad // TB,),
        in_specs=[
            pl.BlockSpec((TB, 2 * S, D), lambda i: (i, 0, 0)),   # embeddings tile
            pl.BlockSpec((2 * S, NF), lambda i: (0, 0)),         # conv tap 0
            pl.BlockSpec((2 * S, NF), lambda i: (0, 0)),         # conv tap 1
            pl.BlockSpec((1, NF), lambda i: (0, 0)),             # conv bias
            pl.BlockSpec((NF, NH), lambda i: (0, 0)),            # fc (BN folded)
            pl.BlockSpec((1, NH), lambda i: (0, 0)),
            pl.BlockSpec((NH, NO), lambda i: (0, 0)),            # merged heads
            pl.BlockSpec((1, NO), lambda i: (0, 0)),
        ],
        out_specs=pl.BlockSpec((TB, NO), lambda i: (i, 0)),
        scratch_shapes=[pltpu.VMEM((TB, NF), jnp.float32)],
    )

    out = pl.pallas_call(
        meta_kernel,
        out_shape=jax.ShapeDtypeStruct((Bpad, NO), jnp.float32),
        grid_spec=grid_spec,
        compiler_params=pltpu.CompilerParams(dimension_semantics=("parallel",)),
    )(e2, w0, w1, cb, wfc, bfc, wo, bo)

    return out[:B, :nd], out[:B, nd:nd + nb]


def init_params(key, vocab_size, emb_dim, num_out):
    ks = jax.random.split(key, 12)

    def uni(k, shape, fan_in):
        bound = 1.0 / np.sqrt(fan_in)
        return jax.random.uniform(k, shape, jnp.float32, -bound, bound)

    return dict(
        embC=jax.random.normal(ks[0], (vocab_size[0], emb_dim), jnp.float32),
        embA=jax.random.normal(ks[1], (vocab_size[1], emb_dim), jnp.float32),
        wC=uni(ks[2], (64, emb_dim, 2), emb_dim * 2),   # Conv1d(emb_dim, 64, 2)
        bC=uni(ks[3], (64,), emb_dim * 2),
        wA=uni(ks[4], (50, emb_dim, 2), emb_dim * 2),   # Conv1d(emb_dim, 50, 2)
        bA=uni(ks[5], (50,), emb_dim * 2),
        bn_mean=jnp.zeros((114,), jnp.float32),
        bn_var=jnp.ones((114,), jnp.float32),
        Wfc=uni(ks[6], (50, 114), 114),                 # Linear(114, 50)
        bfc=uni(ks[7], (50,), 114),
        Wd=uni(ks[8], (num_out[0], 50), 50),            # Linear(50, num_out[0])
        bd=uni(ks[9], (num_out[0],), 50),
        Wb=uni(ks[10], (num_out[1], 50), 50),           # Linear(50, num_out[1])
        bb=uni(ks[11], (num_out[1],), 50),
    )


def reference_forward(x_C, x_A, p):
    """Pure-JAX f32 reference matching the PyTorch forward (eval mode)."""
    hp = jax.lax.Precision.HIGHEST
    eC = p["embC"][x_C]          # (B, S, D)
    eA = p["embA"][x_A]

    def branch(e, w, b):         # w: (O, S, 2); conv over the emb ("length") dim
        x0, x1 = e[:, :, :-1], e[:, :, 1:]
        out = (jnp.einsum("bsd,os->bod", x0, w[:, :, 0], precision=hp)
               + jnp.einsum("bsd,os->bod", x1, w[:, :, 1], precision=hp)
               + b[None, :, None])
        return jnp.max(jnp.maximum(out, 0.0), axis=2)   # ReLU + MaxPool1d(99) + Flatten

    x = jnp.concatenate([branch(eC, p["wC"], p["bC"]),
                         branch(eA, p["wA"], p["bA"])], axis=1)      # (B, 114)
    x = (x - p["bn_mean"]) / jnp.sqrt(p["bn_var"] + 1e-5)
    h = jnp.maximum(jnp.dot(x, p["Wfc"].T, precision=hp) + p["bfc"], 0.0)
    yd = jax.nn.sigmoid(jnp.dot(h, p["Wd"].T, precision=hp) + p["bd"])
    yb = jax.nn.sigmoid(jnp.dot(h, p["Wb"].T, precision=hp) + p["bb"])
    return yd, yb


if __name__ == "__main__":
    key = jax.random.PRNGKey(0)
    kp, kc, ka, kc2, ka2 = jax.random.split(key, 5)

    vocab_size = [32, 24]
    num_out = [3, 5]
    params = init_params(kp, vocab_size, EMB_DIM, num_out)

    fwd = jax.jit(meta_model_forward, static_argnames=("tb",))

    # Case 1: batch=2 (single grid step, TB == B).
    B = 2
    x_C = jax.random.randint(kc, (B, SEQ_LEN), 0, vocab_size[0], dtype=jnp.int32)
    x_A = jax.random.randint(ka, (B, SEQ_LEN), 0, vocab_size[1], dtype=jnp.int32)
    yd, yb = fwd(x_C, x_A, params)
    yd = jax.block_until_ready(yd)
    yb = jax.block_until_ready(yb)
    rd, rb = reference_forward(x_C, x_A, params)
    assert yd.shape == (B, num_out[0]) and yb.shape == (B, num_out[1])
    np.testing.assert_allclose(np.asarray(yd), np.asarray(rd), rtol=2e-3, atol=2e-3)
    np.testing.assert_allclose(np.asarray(yb), np.asarray(rb), rtol=2e-3, atol=2e-3)

    # Case 2: batch=20 with tb=8 -> exercises multi-step grid + batch padding.
    B2 = 20
    x_C2 = jax.random.randint(kc2, (B2, SEQ_LEN), 0, vocab_size[0], dtype=jnp.int32)
    x_A2 = jax.random.randint(ka2, (B2, SEQ_LEN), 0, vocab_size[1], dtype=jnp.int32)
    yd2, yb2 = fwd(x_C2, x_A2, params, tb=8)
    yd2 = jax.block_until_ready(yd2)
    yb2 = jax.block_until_ready(yb2)
    rd2, rb2 = reference_forward(x_C2, x_A2, params)
    np.testing.assert_allclose(np.asarray(yd2), np.asarray(rd2), rtol=2e-3, atol=2e-3)
    np.testing.assert_allclose(np.asarray(yb2), np.asarray(rb2), rtol=2e-3, atol=2e-3)

    print("KERNEL_OK")
</pallas_src>

<mosaic_0001>
module attributes {stable_mosaic.version = 11 : i64} {
  func.func @meta_kernel(%arg0: i32, %arg1: memref<2x200x100xbf16, #tpu.memory_space<vmem>>, %arg2: memref<200x128xbf16, #tpu.memory_space<vmem>>, %arg3: memref<200x128xbf16, #tpu.memory_space<vmem>>, %arg4: memref<1x128xf32, #tpu.memory_space<vmem>>, %arg5: memref<128x128xf32, #tpu.memory_space<vmem>>, %arg6: memref<1x128xf32, #tpu.memory_space<vmem>>, %arg7: memref<128x128xf32, #tpu.memory_space<vmem>>, %arg8: memref<1x128xf32, #tpu.memory_space<vmem>>, %arg9: memref<2x128xf32, #tpu.memory_space<vmem>>, %arg10: memref<2x128xf32, #tpu.memory_space<vmem>>) attributes {dimension_semantics = [#tpu.dimension_semantics<parallel>], iteration_bounds = array<i64: 1>, scalar_prefetch = 0 : i64, scratch_operands = 1 : i64, tpu.core_type = #tpu.core_type<tc>, window_params = [{transform_indices = @transform_0, window_bounds = array<i64: 2, 200, 100>}, {pipeline_mode = #tpu.pipeline_mode<synchronous>, transform_indices = @transform_1, window_bounds = array<i64: 200, 128>}, {pipeline_mode = #tpu.pipeline_mode<synchronous>, transform_indices = @transform_2, window_bounds = array<i64: 200, 128>}, {pipeline_mode = #tpu.pipeline_mode<synchronous>, transform_indices = @transform_3, window_bounds = array<i64: 1, 128>}, {pipeline_mode = #tpu.pipeline_mode<synchronous>, transform_indices = @transform_4, window_bounds = array<i64: 128, 128>}, {pipeline_mode = #tpu.pipeline_mode<synchronous>, transform_indices = @transform_5, window_bounds = array<i64: 1, 128>}, {pipeline_mode = #tpu.pipeline_mode<synchronous>, transform_indices = @transform_6, window_bounds = array<i64: 128, 128>}, {pipeline_mode = #tpu.pipeline_mode<synchronous>, transform_indices = @transform_7, window_bounds = array<i64: 1, 128>}, {transform_indices = @transform_8, window_bounds = array<i64: 2, 128>}]} {
    %c0 = arith.constant 0 : index
    %c0_0 = arith.constant 0 : index
    %0 = vector.load %arg2[%c0, %c0_0] : memref<200x128xbf16, #tpu.memory_space<vmem>>, vector<200x128xbf16>
    %c0_1 = arith.constant 0 : index
    %c0_2 = arith.constant 0 : index
    %1 = vector.load %arg3[%c0_1, %c0_2] : memref<200x128xbf16, #tpu.memory_space<vmem>>, vector<200x128xbf16>
    %c0_3 = arith.constant 0 : index
    %c0_4 = arith.constant 0 : index
    %2 = vector.load %arg4[%c0_3, %c0_4] : memref<1x128xf32, #tpu.memory_space<vmem>>, vector<1x128xf32>
    %c0_5 = arith.constant 0 : index
    %c0_6 = arith.constant 0 : index
    %c0_7 = arith.constant 0 : index
    %3 = vector.load %arg1[%c0_5, %c0_6, %c0_7] : memref<2x200x100xbf16, #tpu.memory_space<vmem>>, vector<1x200x100xbf16>
    %4 = vector.shape_cast %3 : vector<1x200x100xbf16> to vector<200x100xbf16>
    %cst = arith.constant dense<0.000000e+00> : vector<100x128xf32>
    %5 = tpu.matmul %4, %0, %cst {dimension_numbers = #tpu.dot_dimension_numbers<[0], [0], [1], [1], [0, 1, 1, 1], [], []>} : vector<200x100xbf16>, vector<200x128xbf16>, vector<100x128xf32> -> vector<100x128xf32>
    %cst_8 = arith.constant dense<0.000000e+00> : vector<100x128xf32>
    %6 = tpu.matmul %4, %1, %cst_8 {dimension_numbers = #tpu.dot_dimension_numbers<[0], [0], [1], [1], [0, 1, 1, 1], [], []>} : vector<200x100xbf16>, vector<200x128xbf16>, vector<100x128xf32> -> vector<100x128xf32>
    %7 = vector.extract_strided_slice %5 {offsets = [0, 0], sizes = [99, 128], strides = [1, 1]} : vector<100x128xf32> to vector<99x128xf32>
    %8 = vector.extract_strided_slice %6 {offsets = [1, 0], sizes = [99, 128], strides = [1, 1]} : vector<100x128xf32> to vector<99x128xf32>
    %9 = arith.addf %7, %8 : vector<99x128xf32>
    %10 = vector.broadcast %2 : vector<1x128xf32> to vector<99x128xf32>
    %11 = arith.addf %9, %10 : vector<99x128xf32>
    %cst_9 = arith.constant 0.000000e+00 : f32
    %12 = vector.broadcast %cst_9 : f32 to vector<99x128xf32>
    %13 = arith.maximumf %11, %12 : vector<99x128xf32>
    %cst_10 = arith.constant dense<0xFF800000> : vector<128xf32>
    %14 = vector.multi_reduction <maximumf>, %13, %cst_10 [0] : vector<99x128xf32> to vector<128xf32>
    %15 = vector.shape_cast %14 : vector<128xf32> to vector<1x128xf32>
    %c0_11 = arith.constant 0 : index
    %c0_12 = arith.constant 0 : index
    %16 = vector.load %arg10[%c0_11, %c0_12] : memref<2x128xf32, #tpu.memory_space<vmem>>, vector<1x128xf32>
    tpu.vector_store %arg10[%c0_11, %c0_12], %15 {strides = array<i32>} : memref<2x128xf32, #tpu.memory_space<vmem>>, vector<1x128xf32>,
    %c1 = arith.constant 1 : index
    %c0_13 = arith.constant 0 : index
    %c0_14 = arith.constant 0 : index
    %17 = vector.load %arg1[%c1, %c0_13, %c0_14] : memref<2x200x100xbf16, #tpu.memory_space<vmem>>, vector<1x200x100xbf16>
    %18 = vector.shape_cast %17 : vector<1x200x100xbf16> to vector<200x100xbf16>
    %cst_15 = arith.constant dense<0.000000e+00> : vector<100x128xf32>
    %19 = tpu.matmul %18, %0, %cst_15 {dimension_numbers = #tpu.dot_dimension_numbers<[0], [0], [1], [1], [0, 1, 1, 1], [], []>} : vector<200x100xbf16>, vector<200x128xbf16>, vector<100x128xf32> -> vector<100x128xf32>
    %cst_16 = arith.constant dense<0.000000e+00> : vector<100x128xf32>
    %20 = tpu.matmul %18, %1, %cst_16 {dimension_numbers = #tpu.dot_dimension_numbers<[0], [0], [1], [1], [0, 1, 1, 1], [], []>} : vector<200x100xbf16>, vector<200x128xbf16>, vector<100x128xf32> -> vector<100x128xf32>
    %21 = vector.extract_strided_slice %19 {offsets = [0, 0], sizes = [99, 128], strides = [1, 1]} : vector<100x128xf32> to vector<99x128xf32>
    %22 = vector.extract_strided_slice %20 {offsets = [1, 0], sizes = [99, 128], strides = [1, 1]} : vector<100x128xf32> to vector<99x128xf32>
    %23 = arith.addf %21, %22 : vector<99x128xf32>
    %24 = vector.broadcast %2 : vector<1x128xf32> to vector<99x128xf32>
    %25 = arith.addf %23, %24 : vector<99x128xf32>
    %cst_17 = arith.constant 0.000000e+00 : f32
    %26 = vector.broadcast %cst_17 : f32 to vector<99x128xf32>
    %27 = arith.maximumf %25, %26 : vector<99x128xf32>
    %cst_18 = arith.constant dense<0xFF800000> : vector<128xf32>
    %28 = vector.multi_reduction <maximumf>, %27, %cst_18 [0] : vector<99x128xf32> to vector<128xf32>
    %29 = vector.shape_cast %28 : vector<128xf32> to vector<1x128xf32>
    %c1_19 = arith.constant 1 : index
    %c0_20 = arith.constant 0 : index
    %30 = vector.load %arg10[%c1_19, %c0_20] : memref<2x128xf32, #tpu.memory_space<vmem>>, vector<1x128xf32>
    tpu.vector_store %arg10[%c1_19, %c0_20], %29 {strides = array<i32>} : memref<2x128xf32, #tpu.memory_space<vmem>>, vector<1x128xf32>,
    %c0_21 = arith.constant 0 : index
    %c0_22 = arith.constant 0 : index
    %31 = vector.load %arg10[%c0_21, %c0_22] : memref<2x128xf32, #tpu.memory_space<vmem>>, vector<2x128xf32>
    %c0_23 = arith.constant 0 : index
    %c0_24 = arith.constant 0 : index
    %32 = vector.load %arg5[%c0_23, %c0_24] : memref<128x128xf32, #tpu.memory_space<vmem>>, vector<128x128xf32>
    %cst_25 = arith.constant dense<0.000000e+00> : vector<2x128xf32>
    %33 = tpu.matmul %31, %32, %cst_25 {dimension_numbers = #tpu.dot_dimension_numbers<[1], [0], [0], [1], [0, 0, 1, 1], [], []>, precision = #tpu.contract_precision<fp32>} : vector<2x128xf32>, vector<128x128xf32>, vector<2x128xf32> -> vector<2x128xf32>
    %c0_26 = arith.constant 0 : index
    %c0_27 = arith.constant 0 : index
    %34 = vector.load %arg6[%c0_26, %c0_27] : memref<1x128xf32, #tpu.memory_space<vmem>>, vector<1x128xf32>
    %35 = vector.broadcast %34 : vector<1x128xf32> to vector<2x128xf32>
    %36 = arith.addf %33, %35 : vector<2x128xf32>
    %cst_28 = arith.constant 0.000000e+00 : f32
    %37 = vector.broadcast %cst_28 : f32 to vector<2x128xf32>
    %38 = arith.maximumf %36, %37 : vector<2x128xf32>
    %c0_29 = arith.constant 0 : index
    %c0_30 = arith.constant 0 : index
    %39 = vector.load %arg7[%c0_29, %c0_30] : memref<128x128xf32, #tpu.memory_space<vmem>>, vector<128x128xf32>
    %cst_31 = arith.constant dense<0.000000e+00> : vector<2x128xf32>
    %40 = tpu.matmul %38, %39, %cst_31 {dimension_numbers = #tpu.dot_dimension_numbers<[1], [0], [0], [1], [0, 0, 1, 1], [], []>, precision = #tpu.contract_precision<fp32>} : vector<2x128xf32>, vector<128x128xf32>, vector<2x128xf32> -> vector<2x128xf32>
    %c0_32 = arith.constant 0 : index
    %c0_33 = arith.constant 0 : index
    %41 = vector.load %arg8[%c0_32, %c0_33] : memref<1x128xf32, #tpu.memory_space<vmem>>, vector<1x128xf32>
    %42 = vector.broadcast %41 : vector<1x128xf32> to vector<2x128xf32>
    %43 = arith.addf %40, %42 : vector<2x128xf32>
    %cst_34 = arith.constant 0.000000e+00 : f32
    %44 = vector.broadcast %cst_34 : f32 to vector<2x128xf32>
    %45 = arith.subf %44, %43 : vector<2x128xf32>
    %46 = math.exp %45 : vector<2x128xf32>
    %cst_35 = arith.constant 1.000000e+00 : f32
    %47 = vector.broadcast %cst_35 : f32 to vector<2x128xf32>
    %48 = arith.addf %47, %46 : vector<2x128xf32>
    %cst_36 = arith.constant 1.000000e+00 : f32
    %49 = vector.broadcast %cst_36 : f32 to vector<2x128xf32>
    %50 = arith.divf %49, %48 : vector<2x128xf32>
    %c0_37 = arith.constant 0 : index
    %c0_38 = arith.constant 0 : index
    %51 = vector.load %arg9[%c0_37, %c0_38] : memref<2x128xf32, #tpu.memory_space<vmem>>, vector<2x128xf32>
    tpu.vector_store %arg9[%c0_37, %c0_38], %50 {strides = array<i32>} : memref<2x128xf32, #tpu.memory_space<vmem>>, vector<2x128xf32>,
    return
  }
  func.func @transform_0(%arg0: i32) -> (i32, i32, i32) {
    %c0_i32 = arith.constant 0 : i32
    %c0_i32_0 = arith.constant 0 : i32
    %c0_i32_1 = arith.constant 0 : i32
    return %arg0, %c0_i32, %c0_i32_0 : i32, i32, i32
  }
  func.func @transform_1(%arg0: i32) -> (i32, i32) {
    %c0_i32 = arith.constant 0 : i32
    %c0_i32_0 = arith.constant 0 : i32
    %c0_i32_1 = arith.constant 0 : i32
    return %c0_i32, %c0_i32_0 : i32, i32
  }
  func.func @transform_2(%arg0: i32) -> (i32, i32) {
    %c0_i32 = arith.constant 0 : i32
    %c0_i32_0 = arith.constant 0 : i32
    %c0_i32_1 = arith.constant 0 : i32
    return %c0_i32, %c0_i32_0 : i32, i32
  }
  func.func @transform_3(%arg0: i32) -> (i32, i32) {
    %c0_i32 = arith.constant 0 : i32
    %c0_i32_0 = arith.constant 0 : i32
    %c0_i32_1 = arith.constant 0 : i32
    return %c0_i32, %c0_i32_0 : i32, i32
  }
  func.func @transform_4(%arg0: i32) -> (i32, i32) {
    %c0_i32 = arith.constant 0 : i32
    %c0_i32_0 = arith.constant 0 : i32
    %c0_i32_1 = arith.constant 0 : i32
    return %c0_i32, %c0_i32_0 : i32, i32
  }
  func.func @transform_5(%arg0: i32) -> (i32, i32) {
    %c0_i32 = arith.constant 0 : i32
    %c0_i32_0 = arith.constant 0 : i32
    %c0_i32_1 = arith.constant 0 : i32
    return %c0_i32, %c0_i32_0 : i32, i32
  }
  func.func @transform_6(%arg0: i32) -> (i32, i32) {
    %c0_i32 = arith.constant 0 : i32
    %c0_i32_0 = arith.constant 0 : i32
    %c0_i32_1 = arith.constant 0 : i32
    return %c0_i32, %c0_i32_0 : i32, i32
  }
  func.func @transform_7(%arg0: i32) -> (i32, i32) {
    %c0_i32 = arith.constant 0 : i32
    %c0_i32_0 = arith.constant 0 : i32
    %c0_i32_1 = arith.constant 0 : i32
    return %c0_i32, %c0_i32_0 : i32, i32
  }
  func.func @transform_8(%arg0: i32) -> (i32, i32) {
    %c0_i32 = arith.constant 0 : i32
    %c0_i32_0 = arith.constant 0 : i32
    return %arg0, %c0_i32 : i32, i32
  }
}

</mosaic_0001>

<llo_original>
// kernel: meta_model_forward.1
$region0: #{meta_model_forward.1}
  #allocation0 [shape = 'u32[]', space=smem, size = 0x4, offset = 0x4, fixed_abs, tag = 'smem constant byte address 0x4 - core index']
  #allocation1 [shape = 'u32[144,128]{1,0:T(1,128)}', space=vmem, size = 0x12000, scoped, tag = 'internal scratch']
  #allocation2 [shape = 'f32[2,128]{1,0:T(2,128)}', space=vmem, size = 0x400, scoped, tag = 'scratch operand']
  %s0 = inlined_call_operand.vmem [shape: bf16[2,200,100], index: 0, kind: input, shape index: {}]
  %s1 = inlined_call_operand.vmem [shape: bf16[200,128], index: 1, kind: input, shape index: {}]
  %s2 = inlined_call_operand.vmem [shape: bf16[200,128], index: 2, kind: input, shape index: {}]
  %s3 = inlined_call_operand.vmem [shape: f32[1,128], index: 3, kind: input, shape index: {}]
  %s4 = inlined_call_operand.vmem [shape: f32[128,128], index: 4, kind: input, shape index: {}]
  %s5 = inlined_call_operand.vmem [shape: f32[1,128], index: 5, kind: input, shape index: {}]
  %s6 = inlined_call_operand.vmem [shape: f32[128,128], index: 6, kind: input, shape index: {}]
  %s7 = inlined_call_operand.vmem [shape: f32[1,128], index: 7, kind: input, shape index: {}]
  %s8 = inlined_call_operand.vmem [shape: f32[2,128], index: 8, kind: output, shape index: {}]
  %s9 = sld [smem:[#allocation0]]
  $region42: #{meta_model_forward.1} parent=0
    _
  %s11 = ssub.s32 1, %s9
  %s12 = scalar_select 0, %s11, %s9
  // Predicated region
  $region2: #{meta_model_forward.1} parent=0 // pred_check
    _
  $region3: #{meta_model_forward.1} parent=0 // pred_check_branch
    %14 = sbr.rel (0) target = $region5
  $region4: #{meta_model_forward.1} parent=0 // pred_region
    _
  $region5: #{meta_model_forward.1} parent=0 // pred_fallthru
    _
  // Predicated region
  $region6: #{meta_model_forward.1} parent=0 // pred_check
    _
  $region7: #{meta_model_forward.1} parent=0 // pred_check_branch
    %16 = sbr.rel (0) target = $region9
  $region8: #{meta_model_forward.1} parent=0 // pred_region
    _
  $region9: #{meta_model_forward.1} parent=0 // pred_fallthru
    _
  // Predicated region
  $region10: #{meta_model_forward.1} parent=0 // pred_check
    _
  $region11: #{meta_model_forward.1} parent=0 // pred_check_branch
    %18 = sbr.rel (0) target = $region13
  $region12: #{meta_model_forward.1} parent=0 // pred_region
    _
  $region13: #{meta_model_forward.1} parent=0 // pred_fallthru
    _
  // Predicated region
  $region14: #{meta_model_forward.1} parent=0 // pred_check
    _
  $region15: #{meta_model_forward.1} parent=0 // pred_check_branch
    %20 = sbr.rel (0) target = $region17
  $region16: #{meta_model_forward.1} parent=0 // pred_region
    _
  $region17: #{meta_model_forward.1} parent=0 // pred_fallthru
    _
  // Predicated region
  $region18: #{meta_model_forward.1} parent=0 // pred_check
    _
  $region19: #{meta_model_forward.1} parent=0 // pred_check_branch
    %22 = sbr.rel (0) target = $region21
  $region20: #{meta_model_forward.1} parent=0 // pred_region
    _
  $region21: #{meta_model_forward.1} parent=0 // pred_fallthru
    _
  // Predicated region
  $region22: #{meta_model_forward.1} parent=0 // pred_check
    _
  $region23: #{meta_model_forward.1} parent=0 // pred_check_branch
    %24 = sbr.rel (0) target = $region25
  $region24: #{meta_model_forward.1} parent=0 // pred_region
    _
  $region25: #{meta_model_forward.1} parent=0 // pred_fallthru
    _
  // Predicated region
  $region26: #{meta_model_forward.1} parent=0 // pred_check
    _
  $region27: #{meta_model_forward.1} parent=0 // pred_check_branch
    %26 = sbr.rel (0) target = $region29
  $region28: #{meta_model_forward.1} parent=0 // pred_region
    _
  $region29: #{meta_model_forward.1} parent=0 // pred_fallthru
    _
  // Predicated region
  $region30: #{meta_model_forward.1} parent=0 // pred_check
    _
  $region31: #{meta_model_forward.1} parent=0 // pred_check_branch
    %28 = sbr.rel (0) target = $region33
  $region32: #{meta_model_forward.1} parent=0 // pred_region
    _
  $region33: #{meta_model_forward.1} parent=0 // pred_fallthru
    _
  %v30 = vld [vmem:[%s1] sm:$0xf]
  %v31 = vld [vmem:[%s1 + $0x4] sm:$0xf]
  %v32 = vld [vmem:[%s1 + $0x8] sm:$0xf]
  %v33 = vld [vmem:[%s1 + $0xc] sm:$0xf]
  %v34 = vld [vmem:[%s1 + $0x10] sm:$0xf]
  %v35 = vld [vmem:[%s1 + $0x14] sm:$0xf]
  %v36 = vld [vmem:[%s1 + $0x18] sm:$0xf]
  %v37 = vld [vmem:[%s1 + $0x1c] sm:$0xf]
  %v38 = vld [vmem:[%s1 + $0x20] sm:$0xf]
  %v39 = vld [vmem:[%s1 + $0x24] sm:$0xf]
  %v40 = vld [vmem:[%s1 + $0x28] sm:$0xf]
  %v41 = vld [vmem:[%s1 + $0x2c] sm:$0xf]
  %v42 = vld [vmem:[%s1 + $0x30] sm:$0xf]
  %v43 = vld [vmem:[%s1 + $0x34] sm:$0xf]
  %v44 = vld [vmem:[%s1 + $0x38] sm:$0xf]
  %v45 = vld [vmem:[%s1 + $0x3c] sm:$0xf]
  %v46 = vld [vmem:[%s1 + $0x40] sm:$0xf]
  %v47 = vld [vmem:[%s1 + $0x44] sm:$0xf]
  %v48 = vld [vmem:[%s1 + $0x48] sm:$0xf]
  %v49 = vld [vmem:[%s1 + $0x4c] sm:$0xf]
  %v50 = vld [vmem:[%s1 + $0x50] sm:$0xf]
  %v51 = vld [vmem:[%s1 + $0x54] sm:$0xf]
  %v52 = vld [vmem:[%s1 + $0x58] sm:$0xf]
  %v53 = vld [vmem:[%s1 + $0x5c] sm:$0xf]
  %v54 = vld [vmem:[%s1 + $0x60] sm:$0xf]
  %v55 = vld [vmem:[%s2] sm:$0xf]
  %v56 = vld [vmem:[%s2 + $0x4] sm:$0xf]
  %v57 = vld [vmem:[%s2 + $0x8] sm:$0xf]
  %v58 = vld [vmem:[%s2 + $0xc] sm:$0xf]
  %v59 = vld [vmem:[%s2 + $0x10] sm:$0xf]
  %v60 = vld [vmem:[%s2 + $0x14] sm:$0xf]
  %v61 = vld [vmem:[%s2 + $0x18] sm:$0xf]
  %v62 = vld [vmem:[%s2 + $0x1c] sm:$0xf]
  %v63 = vld [vmem:[%s2 + $0x20] sm:$0xf]
  %v64 = vld [vmem:[%s2 + $0x24] sm:$0xf]
  %v65 = vld [vmem:[%s2 + $0x28] sm:$0xf]
  %v66 = vld [vmem:[%s2 + $0x2c] sm:$0xf]
  %v67 = vld [vmem:[%s2 + $0x30] sm:$0xf]
  %v68 = vld [vmem:[%s2 + $0x34] sm:$0xf]
  %v69 = vld [vmem:[%s2 + $0x38] sm:$0xf]
  %v70 = vld [vmem:[%s2 + $0x3c] sm:$0xf]
  %v71 = vld [vmem:[%s2 + $0x40] sm:$0xf]
  %v72 = vld [vmem:[%s2 + $0x44] sm:$0xf]
  %v73 = vld [vmem:[%s2 + $0x48] sm:$0xf]
  %v74 = vld [vmem:[%s2 + $0x4c] sm:$0xf]
  %v75 = vld [vmem:[%s2 + $0x50] sm:$0xf]
  %v76 = vld [vmem:[%s2 + $0x54] sm:$0xf]
  %v77 = vld [vmem:[%s2 + $0x58] sm:$0xf]
  %v78 = vld [vmem:[%s2 + $0x5c] sm:$0xf]
  %v79 = vld [vmem:[%s2 + $0x60] sm:$0xf]
  %v80 = vld [vmem:[%s3] sm:$0x1]
  %v81 = vld [vmem:[%s0] sm:$0xf]
  %v82 = vld [vmem:[%s0 + $0x4] sm:$0xf]
  %v83 = vld [vmem:[%s0 + $0x8] sm:$0xf]
  %v84 = vld [vmem:[%s0 + $0xc] sm:$0xf]
  %v85 = vld [vmem:[%s0 + $0x10] sm:$0xf]
  %v86 = vld [vmem:[%s0 + $0x14] sm:$0xf]
  %v87 = vld [vmem:[%s0 + $0x18] sm:$0xf]
  %v88 = vld [vmem:[%s0 + $0x1c] sm:$0xf]
  %v89 = vld [vmem:[%s0 + $0x20] sm:$0xf]
  %v90 = vld [vmem:[%s0 + $0x24] sm:$0xf]
  %v91 = vld [vmem:[%s0 + $0x28] sm:$0xf]
  %v92 = vld [vmem:[%s0 + $0x2c] sm:$0xf]
  %v93 = vld [vmem:[%s0 + $0x30] sm:$0xf]
  %v94 = vld [vmem:[%s0 + $0x34] sm:$0xf]
  %v95 = vld [vmem:[%s0 + $0x38] sm:$0xf]
  %v96 = vld [vmem:[%s0 + $0x3c] sm:$0xf]
  %v97 = vld [vmem:[%s0 + $0x40] sm:$0xf]
  %v98 = vld [vmem:[%s0 + $0x44] sm:$0xf]
  %v99 = vld [vmem:[%s0 + $0x48] sm:$0xf]
  %v100 = vld [vmem:[%s0 + $0x4c] sm:$0xf]
  %v101 = vld [vmem:[%s0 + $0x50] sm:$0xf]
  %v102 = vld [vmem:[%s0 + $0x54] sm:$0xf]
  %v103 = vld [vmem:[%s0 + $0x58] sm:$0xf]
  %v104 = vld [vmem:[%s0 + $0x5c] sm:$0xf]
  %v105 = vld [vmem:[%s0 + $0x60] sm:$0xf]
  %v131 = vunpack.c.l.b16 %v81
  %v132 = vunpack.c.l.b16 %v82
  %v133 = vunpack.c.l.b16 %v83
  %v134 = vunpack.c.l.b16 %v84
  %v135 = vunpack.c.l.b16 %v85
  %v136 = vunpack.c.l.b16 %v86
  %v137 = vunpack.c.l.b16 %v87
  %v138 = vunpack.c.l.b16 %v88
  %v139 = vunpack.c.l.b16 %v89
  %v140 = vunpack.c.l.b16 %v90
  %v141 = vunpack.c.l.b16 %v91
  %v142 = vunpack.c.l.b16 %v92
  %v143 = vunpack.c.l.b16 %v93
  %v144 = vunpack.c.l.b16 %v94
  %v145 = vunpack.c.l.b16 %v95
  %v146 = vunpack.c.l.b16 %v96
  %v147 = vunpack.c.l.b16 %v97
  %v148 = vunpack.c.l.b16 %v98
  %v149 = vunpack.c.l.b16 %v99
  %v150 = vunpack.c.l.b16 %v100
  %v151 = vunpack.c.l.b16 %v101
  %v152 = vunpack.c.l.b16 %v102
  %v153 = vunpack.c.l.b16 %v103
  %v154 = vunpack.c.l.b16 %v104
  %v155 = vunpack.c.l.b16 %v105
  %v156 = vpack.c.b16 %v132, %v131
  %v157 = vpack.c.b16 %v134, %v133
  %v158 = vpack.c.b16 %v136, %v135
  %v159 = vpack.c.b16 %v138, %v137
  %v160 = vpack.c.b16 %v140, %v139
  %v161 = vpack.c.b16 %v142, %v141
  %v162 = vpack.c.b16 %v144, %v143
  %v163 = vpack.c.b16 %v146, %v145
  %v164 = vpack.c.b16 %v148, %v147
  %v165 = vpack.c.b16 %v150, %v149
  %v166 = vpack.c.b16 %v152, %v151
  %v167 = vpack.c.b16 %v154, %v153
  %v168 = vpack.c.b16 %v155, %v155
  %182 = vxpose.xlu0.c.b16.start [1/8] %v156, 128
  %183 = vxpose.xlu0.c.b16.cont [2/8] %v157, 128
  %184 = vxpose.xlu0.c.b16.cont [3/8] %v158, 128
  %185 = vxpose.xlu0.c.b16.cont [4/8] %v159, 128
  %186 = vxpose.xlu0.c.b16.cont [5/8] %v160, 128
  %187 = vxpose.xlu0.c.b16.cont [6/8] %v161, 128
  %188 = vxpose.xlu0.c.b16.cont [7/8] %v162, 128
  %189 = vxpose.xlu0.c.b16.end [8/8] %v163, 128
  %v190 = vpop.trf.xlu0
  %v191 = vpop.trf.xlu0
  %v192 = vpop.trf.xlu0
  %v193 = vpop.trf.xlu0
  %v194 = vpop.trf.xlu0
  %v195 = vpop.trf.xlu0
  %v196 = vpop.trf.xlu0
  %v197 = vpop.trf.xlu0
  %198 = vxpose.xlu0.c.b16.start [1/8] %v164, 128
  %199 = vxpose.xlu0.c.b16.cont [2/8] %v165, 128
  %200 = vxpose.xlu0.c.b16.cont [3/8] %v166, 128
  %201 = vxpose.xlu0.c.b16.cont [4/8] %v167, 128
  %202 = vxpose.xlu0.c.b16.cont [5/8] %v168, 128
  %203 = vxpose.xlu0.c.b16.cont [6/8] 0, 128
  %204 = vxpose.xlu0.c.b16.cont [7/8] 0, 128
  %205 = vxpose.xlu0.c.b16.end [8/8] 0, 128
  %v206 = vpop.trf.xlu0
  %v207 = vpop.trf.xlu0
  %v208 = vpop.trf.xlu0
  %v209 = vpop.trf.xlu0
  %v210 = vpop.trf.xlu0
  %v211 = vpop.trf.xlu0
  %v212 = vpop.trf.xlu0
  %v213 = vpop.trf.xlu0
  %v239 = vunpack.c.l.b16 %v30
  %v240 = vunpack.c.l.b16 %v31
  %v241 = vunpack.c.l.b16 %v32
  %v242 = vunpack.c.l.b16 %v33
  %v243 = vunpack.c.l.b16 %v34
  %v244 = vunpack.c.l.b16 %v35
  %v245 = vunpack.c.l.b16 %v36
  %v246 = vunpack.c.l.b16 %v37
  %v247 = vunpack.c.l.b16 %v38
  %v248 = vunpack.c.l.b16 %v39
  %v249 = vunpack.c.l.b16 %v40
  %v250 = vunpack.c.l.b16 %v41
  %v251 = vunpack.c.l.b16 %v42
  %v252 = vunpack.c.l.b16 %v43
  %v253 = vunpack.c.l.b16 %v44
  %v254 = vunpack.c.l.b16 %v45
  %v255 = vunpack.c.l.b16 %v46
  %v256 = vunpack.c.l.b16 %v47
  %v257 = vunpack.c.l.b16 %v48
  %v258 = vunpack.c.l.b16 %v49
  %v259 = vunpack.c.l.b16 %v50
  %v260 = vunpack.c.l.b16 %v51
  %v261 = vunpack.c.l.b16 %v52
  %v262 = vunpack.c.l.b16 %v53
  %v263 = vunpack.c.l.b16 %v54
  %v264 = vpack.c.b16 %v240, %v239
  %v265 = vpack.c.b16 %v242, %v241
  %v266 = vpack.c.b16 %v244, %v243
  %v267 = vpack.c.b16 %v246, %v245
  %v268 = vpack.c.b16 %v248, %v247
  %v269 = vpack.c.b16 %v250, %v249
  %v270 = vpack.c.b16 %v252, %v251
  %v271 = vpack.c.b16 %v254, %v253
  %v272 = vpack.c.b16 %v256, %v255
  %v273 = vpack.c.b16 %v258, %v257
  %v274 = vpack.c.b16 %v260, %v259
  %v275 = vpack.c.b16 %v262, %v261
  %v276 = vpack.c.b16 %v263, %v263
  %vm289 = vcmask 588800
  %v291 = vsel %vm289, %v206, 0
  %v294 = vsel %vm289, %v207, 0
  %v297 = vsel %vm289, %v208, 0
  %v300 = vsel %vm289, %v209, 0
  %v303 = vsel %vm289, %v210, 0
  %v306 = vsel %vm289, %v211, 0
  %v309 = vsel %vm289, %v212, 0
  %vm311 = vcmask 1043456
  %v313 = vsel %vm311, %v276, 0
  %315 = vmatprep.subr.bf16.mxu0 0
  %316 = vmatpush1.bf16.msra.mxu0 %v264
  %317 = vmatprep.subr.bf16.mxu0 0
  %318 = vmatpush1.bf16.msra.mxu0 %v265
  %319 = vmatprep.subr.bf16.mxu0 0
  %320 = vmatpush1.bf16.msra.mxu0 %v266
  %321 = vmatprep.subr.bf16.mxu0 0
  %322 = vmatpush1.bf16.msra.mxu0 %v267
  %323 = vmatprep.subr.bf16.mxu0 0
  %324 = vmatpush1.bf16.msra.mxu0 %v268
  %325 = vmatprep.subr.bf16.mxu0 0
  %326 = vmatpush1.bf16.msra.mxu0 %v269
  %327 = vmatprep.subr.bf16.mxu0 0
  %328 = vmatpush1.bf16.msra.mxu0 %v270
  %329 = vmatprep.subr.bf16.mxu0 0
  %330 = vmatpush1.bf16.msra.mxu0 %v271
  %331 = vmatprep.subr.bf16.mxu0 0
  %332 = vmatpush1.bf16.msra.mxu0 %v272
  %333 = vmatprep.subr.bf16.mxu0 0
  %334 = vmatpush1.bf16.msra.mxu0 %v273
  %335 = vmatprep.subr.bf16.mxu0 0
  %336 = vmatpush1.bf16.msra.mxu0 %v274
  %337 = vmatprep.subr.bf16.mxu0 0
  %338 = vmatpush1.bf16.msra.mxu0 %v275
  %339 = vmatprep.subr.bf16.mxu0 0
  %340 = vmatpush1.bf16.msra.mxu0 %v313
  %341 = vmatprep.subr.bf16.mxu0 0
  %342 = vmatpush1.bf16.msra.mxu0 0
  %343 = vmatprep.subr.bf16.mxu0 0
  %344 = vmatpush1.bf16.msra.mxu0 0
  %345 = vmatprep.subr.bf16.mxu0 0
  %346 = vmatpush1.bf16.msra.mxu0 0
  %347 = vmatprep.mubr.bf16.mxu0 %v291
  %348 = vmatmul.mubr.bf16.gmra.mrb[0].mxu0 %v190
  %v349 = vpop.f32.mrb[0].mxu0
  %v350 = vadd.f32 0.0, %v349
  %v351 = vpop.f32.mrb[0].mxu0
  %v352 = vpop.f32.mrb[0].mxu0
  %v353 = vadd.f32 0.0, %v352
  %v354 = vpop.f32.mrb[0].mxu0
  %355 = vmatprep.mubr.bf16.mxu0 %v294
  %356 = vmatmul.mubr.bf16.gmra.mrb[0].mxu0 %v191
  %v357 = vpop.f32.mrb[0].mxu0
  %v358 = vadd.f32 0.0, %v357
  %v359 = vpop.f32.mrb[0].mxu0
  %v360 = vpop.f32.mrb[0].mxu0
  %v361 = vadd.f32 0.0, %v360
  %v362 = vpop.f32.mrb[0].mxu0
  %363 = vmatprep.mubr.bf16.mxu0 %v297
  %364 = vmatmul.mubr.bf16.gmra.mrb[0].mxu0 %v192
  %v365 = vpop.f32.mrb[0].mxu0
  %v366 = vadd.f32 0.0, %v365
  %v367 = vpop.f32.mrb[0].mxu0
  %v368 = vpop.f32.mrb[0].mxu0
  %v369 = vadd.f32 0.0, %v368
  %v370 = vpop.f32.mrb[0].mxu0
  %371 = vmatprep.mubr.bf16.mxu0 %v300
  %372 = vmatmul.mubr.bf16.gmra.mrb[0].mxu0 %v193
  %v373 = vpop.f32.mrb[0].mxu0
  %v374 = vadd.f32 0.0, %v373
  %v375 = vpop.f32.mrb[0].mxu0
  %v376 = vpop.f32.mrb[0].mxu0
  %v377 = vadd.f32 0.0, %v376
  %v378 = vpop.f32.mrb[0].mxu0
  %379 = vmatprep.mubr.bf16.mxu0 %v303
  %380 = vmatmul.mubr.bf16.gmra.mrb[0].mxu0 %v194
  %v381 = vpop.f32.mrb[0].mxu0
  %v382 = vadd.f32 0.0, %v381
  %v383 = vpop.f32.mrb[0].mxu0
  %v384 = vpop.f32.mrb[0].mxu0
  %v385 = vadd.f32 0.0, %v384
  %v386 = vpop.f32.mrb[0].mxu0
  %387 = vmatprep.mubr.bf16.mxu0 %v306
  %388 = vmatmul.mubr.bf16.gmra.mrb[0].mxu0 %v195
  %v389 = vpop.f32.mrb[0].mxu0
  %v390 = vadd.f32 0.0, %v389
  %v391 = vpop.f32.mrb[0].mxu0
  %v392 = vpop.f32.mrb[0].mxu0
  %v393 = vadd.f32 0.0, %v392
  %v394 = vpop.f32.mrb[0].mxu0
  %395 = vmatprep.mubr.bf16.mxu0 %v309
  %396 = vmatmul.mubr.bf16.gmra.mrb[0].mxu0 %v196
  %v397 = vpop.f32.mrb[0].mxu0
  %v398 = vadd.f32 0.0, %v397
  %v399 = vpop.f32.mrb[0].mxu0
  %v400 = vpop.f32.mrb[0].mxu0
  %v401 = vpop.f32.mrb[0].mxu0
  %402 = vdwg.mxu0
  %v428 = vunpack.c.l.b16 %v55
  %v429 = vunpack.c.l.b16 %v56
  %v430 = vunpack.c.l.b16 %v57
  %v431 = vunpack.c.l.b16 %v58
  %v432 = vunpack.c.l.b16 %v59
  %v433 = vunpack.c.l.b16 %v60
  %v434 = vunpack.c.l.b16 %v61
  %v435 = vunpack.c.l.b16 %v62
  %v436 = vunpack.c.l.b16 %v63
  %v437 = vunpack.c.l.b16 %v64
  %v438 = vunpack.c.l.b16 %v65
  %v439 = vunpack.c.l.b16 %v66
  %v440 = vunpack.c.l.b16 %v67
  %v441 = vunpack.c.l.b16 %v68
  %v442 = vunpack.c.l.b16 %v69
  %v443 = vunpack.c.l.b16 %v70
  %v444 = vunpack.c.l.b16 %v71
  %v445 = vunpack.c.l.b16 %v72
  %v446 = vunpack.c.l.b16 %v73
  %v447 = vunpack.c.l.b16 %v74
  %v448 = vunpack.c.l.b16 %v75
  %v449 = vunpack.c.l.b16 %v76
  %v450 = vunpack.c.l.b16 %v77
  %v451 = vunpack.c.l.b16 %v78
  %v452 = vunpack.c.l.b16 %v79
  %v453 = vpack.c.b16 %v429, %v428
  %v454 = vpack.c.b16 %v431, %v430
  %v455 = vpack.c.b16 %v433, %v432
  %v456 = vpack.c.b16 %v435, %v434
  %v457 = vpack.c.b16 %v437, %v436
  %v458 = vpack.c.b16 %v439, %v438
  %v459 = vpack.c.b16 %v441, %v440
  %v460 = vpack.c.b16 %v443, %v442
  %v461 = vpack.c.b16 %v445, %v444
  %v462 = vpack.c.b16 %v447, %v446
  %v463 = vpack.c.b16 %v449, %v448
  %v464 = vpack.c.b16 %v451, %v450
  %v465 = vpack.c.b16 %v452, %v452
  %v479 = vsel %vm311, %v465, 0
  %481 = vmatprep.subr.bf16.mxu0 0
  %482 = vmatpush1.bf16.msra.mxu0 %v453
  %483 = vmatprep.subr.bf16.mxu0 0
  %484 = vmatpush1.bf16.msra.mxu0 %v454
  %485 = vmatprep.subr.bf16.mxu0 0
  %486 = vmatpush1.bf16.msra.mxu0 %v455
  %487 = vmatprep.subr.bf16.mxu0 0
  %488 = vmatpush1.bf16.msra.mxu0 %v456
  %489 = vmatprep.subr.bf16.mxu0 0
  %490 = vmatpush1.bf16.msra.mxu0 %v457
  %491 = vmatprep.subr.bf16.mxu0 0
  %492 = vmatpush1.bf16.msra.mxu0 %v458
  %493 = vmatprep.subr.bf16.mxu0 0
  %494 = vmatpush1.bf16.msra.mxu0 %v459
  %495 = vmatprep.subr.bf16.mxu0 0
  %496 = vmatpush1.bf16.msra.mxu0 %v460
  %497 = vmatprep.subr.bf16.mxu0 0
  %498 = vmatpush1.bf16.msra.mxu0 %v461
  %499 = vmatprep.subr.bf16.mxu0 0
  %500 = vmatpush1.bf16.msra.mxu0 %v462
  %501 = vmatprep.subr.bf16.mxu0 0
  %502 = vmatpush1.bf16.msra.mxu0 %v463
  %503 = vmatprep.subr.bf16.mxu0 0
  %504 = vmatpush1.bf16.msra.mxu0 %v464
  %505 = vmatprep.subr.bf16.mxu0 0
  %506 = vmatpush1.bf16.msra.mxu0 %v479
  %507 = vmatprep.subr.bf16.mxu0 0
  %508 = vmatpush1.bf16.msra.mxu0 0
  %509 = vmatprep.subr.bf16.mxu0 0
  %510 = vmatpush1.bf16.msra.mxu0 0
  %511 = vmatprep.subr.bf16.mxu0 0
  %512 = vmatpush1.bf16.msra.mxu0 0
  %513 = vmatprep.mubr.bf16.mxu0 %v291
  %514 = vmatmul.mubr.bf16.gmra.mrb[0].mxu0 %v190
  %v515 = vpop.f32.mrb[0].mxu0
  %v516 = vadd.f32 0.0, %v515
  %v517 = vpop.f32.mrb[0].mxu0
  %v518 = vpop.f32.mrb[0].mxu0
  %v519 = vadd.f32 0.0, %v518
  %v520 = vpop.f32.mrb[0].mxu0
  %521 = vmatprep.mubr.bf16.mxu0 %v294
  %522 = vmatmul.mubr.bf16.gmra.mrb[0].mxu0 %v191
  %v523 = vpop.f32.mrb[0].mxu0
  %v524 = vadd.f32 0.0, %v523
  %v525 = vpop.f32.mrb[0].mxu0
  %v526 = vpop.f32.mrb[0].mxu0
  %v527 = vadd.f32 0.0, %v526
  %v528 = vpop.f32.mrb[0].mxu0
  %529 = vmatprep.mubr.bf16.mxu0 %v297
  %530 = vmatmul.mubr.bf16.gmra.mrb[0].mxu0 %v192
  %v531 = vpop.f32.mrb[0].mxu0
  %v532 = vadd.f32 0.0, %v531
  %v533 = vpop.f32.mrb[0].mxu0
  %v534 = vpop.f32.mrb[0].mxu0
  %v535 = vadd.f32 0.0, %v534
  %v536 = vpop.f32.mrb[0].mxu0
  %537 = vmatprep.mubr.bf16.mxu0 %v300
  %538 = vmatmul.mubr.bf16.gmra.mrb[0].mxu0 %v193
  %v539 = vpop.f32.mrb[0].mxu0
  %v540 = vadd.f32 0.0, %v539
  %v541 = vpop.f32.mrb[0].mxu0
  %v542 = vpop.f32.mrb[0].mxu0
  %v543 = vadd.f32 0.0, %v542
  %v544 = vpop.f32.mrb[0].mxu0
  %545 = vmatprep.mubr.bf16.mxu0 %v303
  %546 = vmatmul.mubr.bf16.gmra.mrb[0].mxu0 %v194
  %v547 = vpop.f32.mrb[0].mxu0
  %v548 = vadd.f32 0.0, %v547
  %v549 = vpop.f32.mrb[0].mxu0
  %v550 = vpop.f32.mrb[0].mxu0
  %v551 = vadd.f32 0.0, %v550
  %v552 = vpop.f32.mrb[0].mxu0
  %553 = vmatprep.mubr.bf16.mxu0 %v306
  %554 = vmatmul.mubr.bf16.gmra.mrb[0].mxu0 %v195
  %v555 = vpop.f32.mrb[0].mxu0
  %v556 = vadd.f32 0.0, %v555
  %v557 = vpop.f32.mrb[0].mxu0
  %v558 = vpop.f32.mrb[0].mxu0
  %v559 = vadd.f32 0.0, %v558
  %v560 = vpop.f32.mrb[0].mxu0
  %561 = vmatprep.mubr.bf16.mxu0 %v309
  %562 = vmatmul.mubr.bf16.gmra.mrb[0].mxu0 %v196
  %v563 = vpop.f32.mrb[0].mxu0
  %v564 = vadd.f32 0.0, %v563
  %v565 = vpop.f32.mrb[0].mxu0
  %v566 = vpop.f32.mrb[0].mxu0
  %v567 = vpop.f32.mrb[0].mxu0
  %568 = vdwg.mxu0
  %vm582 = vcmask 1046528
  %v583 = vrot.slane %v516, 1
  %v584 = vrot.slane %v519, 1
  %v585 = vsel %vm582, %v583, %v584
  %v586 = vrot.slane %v524, 1
  %v587 = vsel %vm582, %v584, %v586
  %v588 = vrot.slane %v527, 1
  %v589 = vsel %vm582, %v586, %v588
  %v590 = vrot.slane %v532, 1
  %v591 = vsel %vm582, %v588, %v590
  %v592 = vrot.slane %v535, 1
  %v593 = vsel %vm582, %v590, %v592
  %v594 = vrot.slane %v540, 1
  %v595 = vsel %vm582, %v592, %v594
  %v596 = vrot.slane %v543, 1
  %v597 = vsel %vm582, %v594, %v596
  %v598 = vrot.slane %v548, 1
  %v599 = vsel %vm582, %v596, %v598
  %v600 = vrot.slane %v551, 1
  %v601 = vsel %vm582, %v598, %v600
  %v602 = vrot.slane %v556, 1
  %v603 = vsel %vm582, %v600, %v602
  %v604 = vrot.slane %v559, 1
  %v605 = vsel %vm582, %v602, %v604
  %v606 = vrot.slane %v564, 1
  %v607 = vsel %vm582, %v604, %v606
  %v621 = vadd.f32 %v350, %v585
  %v622 = vadd.f32 %v353, %v587
  %v623 = vadd.f32 %v358, %v589
  %v624 = vadd.f32 %v361, %v591
  %v625 = vadd.f32 %v366, %v593
  %v626 = vadd.f32 %v369, %v595
  %v627 = vadd.f32 %v374, %v597
  %v628 = vadd.f32 %v377, %v599
  %v629 = vadd.f32 %v382, %v601
  %v630 = vadd.f32 %v385, %v603
  %v631 = vadd.f32 %v390, %v605
  %v632 = vadd.f32 %v393, %v607
  %v633 = vadd.f32 %v398, %v606
  %v635 = vlaneseq
  %v636 = vshrl.u32 %v635, 7
  %v637 = vsub.s32 0, %v636
  %v638 = vrot.slane %v80, %v637
  %v640 = vadd.f32 %v621, %v638
  %v641 = vadd.f32 %v622, %v638
  %v642 = vadd.f32 %v623, %v638
  %v643 = vadd.f32 %v624, %v638
  %v644 = vadd.f32 %v625, %v638
  %v645 = vadd.f32 %v626, %v638
  %v646 = vadd.f32 %v627, %v638
  %v647 = vadd.f32 %v628, %v638
  %v648 = vadd.f32 %v629, %v638
  %v649 = vadd.f32 %v630, %v638
  %v650 = vadd.f32 %v631, %v638
  %v651 = vadd.f32 %v632, %v638
  %v652 = vadd.f32 %v633, %v638
  %v653 = vmax.f32 %v640, 0.0
  %v654 = vmax.f32 %v641, 0.0
  %v655 = vmax.f32 %v642, 0.0
  %v656 = vmax.f32 %v643, 0.0
  %v657 = vmax.f32 %v644, 0.0
  %v658 = vmax.f32 %v645, 0.0
  %v659 = vmax.f32 %v646, 0.0
  %v660 = vmax.f32 %v647, 0.0
  %v661 = vmax.f32 %v648, 0.0
  %v662 = vmax.f32 %v649, 0.0
  %v663 = vmax.f32 %v650, 0.0
  %v664 = vmax.f32 %v651, 0.0
  %v665 = vmax.f32 %v652, 0.0
  %v666 = vmax.f32 %v653, %v657
  %v667 = vmax.f32 %v654, %v658
  %v668 = vmax.f32 %v655, %v659
  %v669 = vmax.f32 %v656, %v660
  %v670 = vmax.f32 %v666, %v661
  %v671 = vmax.f32 %v667, %v662
  %v672 = vmax.f32 %v668, %v663
  %v673 = vmax.f32 %v669, %v664
  %vm674 = vcmask 1042432
  %v675 = vsel %vm674, %v665, -inf
  %v676 = vmax.f32 %v670, %v675
  %v677 = vmax.f32 %v676, %v671
  %v678 = vmax.f32 %v672, %v673
  %v679 = vmax.f32 %v677, %v678
  %v680 = vrot.slane %v679, 4
  %v681 = vmax.f32 %v679, %v680
  %v682 = vrot.slane %v681, 2
  %v683 = vmax.f32 %v681, %v682
  %v684 = vrot.slane %v683, 1
  %v685 = vmax.f32 %v683, %v684
  %686 = vst [vmem:[#allocation2] sm:$0x1] %v685
  %s687 = scalar_lea.vmem %s0, 100
  %v688 = vld [vmem:[%s687] sm:$0xf]
  %v689 = vld [vmem:[%s687 + $0x4] sm:$0xf]
  %v690 = vld [vmem:[%s687 + $0x8] sm:$0xf]
  %v691 = vld [vmem:[%s687 + $0xc] sm:$0xf]
  %v692 = vld [vmem:[%s687 + $0x10] sm:$0xf]
  %v693 = vld [vmem:[%s687 + $0x14] sm:$0xf]
  %v694 = vld [vmem:[%s687 + $0x18] sm:$0xf]
  %v695 = vld [vmem:[%s687 + $0x1c] sm:$0xf]
  %v696 = vld [vmem:[%s687 + $0x20] sm:$0xf]
  %v697 = vld [vmem:[%s687 + $0x24] sm:$0xf]
  %v698 = vld [vmem:[%s687 + $0x28] sm:$0xf]
  %v699 = vld [vmem:[%s687 + $0x2c] sm:$0xf]
  %v700 = vld [vmem:[%s687 + $0x30] sm:$0xf]
  %v701 = vld [vmem:[%s687 + $0x34] sm:$0xf]
  %v702 = vld [vmem:[%s687 + $0x38] sm:$0xf]
  %v703 = vld [vmem:[%s687 + $0x3c] sm:$0xf]
  %v704 = vld [vmem:[%s687 + $0x40] sm:$0xf]
  %v705 = vld [vmem:[%s687 + $0x44] sm:$0xf]
  %v706 = vld [vmem:[%s687 + $0x48] sm:$0xf]
  %v707 = vld [vmem:[%s687 + $0x4c] sm:$0xf]
  %v708 = vld [vmem:[%s687 + $0x50] sm:$0xf]
  %v709 = vld [vmem:[%s687 + $0x54] sm:$0xf]
  %v710 = vld [vmem:[%s687 + $0x58] sm:$0xf]
  %v711 = vld [vmem:[%s687 + $0x5c] sm:$0xf]
  %v712 = vld [vmem:[%s687 + $0x60] sm:$0xf]
  %v738 = vunpack.c.l.b16 %v688
  %v739 = vunpack.c.l.b16 %v689
  %v740 = vunpack.c.l.b16 %v690
  %v741 = vunpack.c.l.b16 %v691
  %v742 = vunpack.c.l.b16 %v692
  %v743 = vunpack.c.l.b16 %v693
  %v744 = vunpack.c.l.b16 %v694
  %v745 = vunpack.c.l.b16 %v695
  %v746 = vunpack.c.l.b16 %v696
  %v747 = vunpack.c.l.b16 %v697
  %v748 = vunpack.c.l.b16 %v698
  %v749 = vunpack.c.l.b16 %v699
  %v750 = vunpack.c.l.b16 %v700
  %v751 = vunpack.c.l.b16 %v701
  %v752 = vunpack.c.l.b16 %v702
  %v753 = vunpack.c.l.b16 %v703
  %v754 = vunpack.c.l.b16 %v704
  %v755 = vunpack.c.l.b16 %v705
  %v756 = vunpack.c.l.b16 %v706
  %v757 = vunpack.c.l.b16 %v707
  %v758 = vunpack.c.l.b16 %v708
  %v759 = vunpack.c.l.b16 %v709
  %v760 = vunpack.c.l.b16 %v710
  %v761 = vunpack.c.l.b16 %v711
  %v762 = vunpack.c.l.b16 %v712
  %v763 = vpack.c.b16 %v739, %v738
  %v764 = vpack.c.b16 %v741, %v740
  %v765 = vpack.c.b16 %v743, %v742
  %v766 = vpack.c.b16 %v745, %v744
  %v767 = vpack.c.b16 %v747, %v746
  %v768 = vpack.c.b16 %v749, %v748
  %v769 = vpack.c.b16 %v751, %v750
  %v770 = vpack.c.b16 %v753, %v752
  %v771 = vpack.c.b16 %v755, %v754
  %v772 = vpack.c.b16 %v757, %v756
  %v773 = vpack.c.b16 %v759, %v758
  %v774 = vpack.c.b16 %v761, %v760
  %v775 = vpack.c.b16 %v762, %v762
  %789 = vxpose.xlu0.c.b16.start [1/8] %v763, 128
  %790 = vxpose.xlu0.c.b16.cont [2/8] %v764, 128
  %791 = vxpose.xlu0.c.b16.cont [3/8] %v765, 128
  %792 = vxpose.xlu0.c.b16.cont [4/8] %v766, 128
  %793 = vxpose.xlu0.c.b16.cont [5/8] %v767, 128
  %794 = vxpose.xlu0.c.b16.cont [6/8] %v768, 128
  %795 = vxpose.xlu0.c.b16.cont [7/8] %v769, 128
  %796 = vxpose.xlu0.c.b16.end [8/8] %v770, 128
  %v797 = vpop.trf.xlu0
  %v798 = vpop.trf.xlu0
  %v799 = vpop.trf.xlu0
  %v800 = vpop.trf.xlu0
  %v801 = vpop.trf.xlu0
  %v802 = vpop.trf.xlu0
  %v803 = vpop.trf.xlu0
  %v804 = vpop.trf.xlu0
  %805 = vxpose.xlu0.c.b16.start [1/8] %v771, 128
  %806 = vxpose.xlu0.c.b16.cont [2/8] %v772, 128
  %807 = vxpose.xlu0.c.b16.cont [3/8] %v773, 128
  %808 = vxpose.xlu0.c.b16.cont [4/8] %v774, 128
  %809 = vxpose.xlu0.c.b16.cont [5/8] %v775, 128
  %810 = vxpose.xlu0.c.b16.cont [6/8] 0, 128
  %811 = vxpose.xlu0.c.b16.cont [7/8] 0, 128
  %812 = vxpose.xlu0.c.b16.end [8/8] 0, 128
  %v813 = vpop.trf.xlu0
  %v814 = vpop.trf.xlu0
  %v815 = vpop.trf.xlu0
  %v816 = vpop.trf.xlu0
  %v817 = vpop.trf.xlu0
  %v818 = vpop.trf.xlu0
  %v819 = vpop.trf.xlu0
  %v820 = vpop.trf.xlu0
  %v822 = vsel %vm289, %v813, 0
  %v825 = vsel %vm289, %v814, 0
  %v828 = vsel %vm289, %v815, 0
  %v831 = vsel %vm289, %v816, 0
  %v834 = vsel %vm289, %v817, 0
  %v837 = vsel %vm289, %v818, 0
  %v840 = vsel %vm289, %v819, 0
  %842 = vmatprep.subr.bf16.mxu0 0
  %843 = vmatpush1.bf16.msra.mxu0 %v264
  %844 = vmatprep.subr.bf16.mxu0 0
  %845 = vmatpush1.bf16.msra.mxu0 %v265
  %846 = vmatprep.subr.bf16.mxu0 0
  %847 = vmatpush1.bf16.msra.mxu0 %v266
  %848 = vmatprep.subr.bf16.mxu0 0
  %849 = vmatpush1.bf16.msra.mxu0 %v267
  %850 = vmatprep.subr.bf16.mxu0 0
  %851 = vmatpush1.bf16.msra.mxu0 %v268
  %852 = vmatprep.subr.bf16.mxu0 0
  %853 = vmatpush1.bf16.msra.mxu0 %v269
  %854 = vmatprep.subr.bf16.mxu0 0
  %855 = vmatpush1.bf16.msra.mxu0 %v270
  %856 = vmatprep.subr.bf16.mxu0 0
  %857 = vmatpush1.bf16.msra.mxu0 %v271
  %858 = vmatprep.subr.bf16.mxu0 0
  %859 = vmatpush1.bf16.msra.mxu0 %v272
  %860 = vmatprep.subr.bf16.mxu0 0
  %861 = vmatpush1.bf16.msra.mxu0 %v273
  %862 = vmatprep.subr.bf16.mxu0 0
  %863 = vmatpush1.bf16.msra.mxu0 %v274
  %864 = vmatprep.subr.bf16.mxu0 0
  %865 = vmatpush1.bf16.msra.mxu0 %v275
  %866 = vmatprep.subr.bf16.mxu0 0
  %867 = vmatpush1.bf16.msra.mxu0 %v313
  %868 = vmatprep.subr.bf16.mxu0 0
  %869 = vmatpush1.bf16.msra.mxu0 0
  %870 = vmatprep.subr.bf16.mxu0 0
  %871 = vmatpush1.bf16.msra.mxu0 0
  %872 = vmatprep.subr.bf16.mxu0 0
  %873 = vmatpush1.bf16.msra.mxu0 0
  %874 = vmatprep.mubr.bf16.mxu0 %v822
  %875 = vmatmul.mubr.bf16.gmra.mrb[0].mxu0 %v797
  %v876 = vpop.f32.mrb[0].mxu0
  %v877 = vadd.f32 0.0, %v876
  %v878 = vpop.f32.mrb[0].mxu0
  %v879 = vpop.f32.mrb[0].mxu0
  %v880 = vadd.f32 0.0, %v879
  %v881 = vpop.f32.mrb[0].mxu0
  %882 = vmatprep.mubr.bf16.mxu0 %v825
  %883 = vmatmul.mubr.bf16.gmra.mrb[0].mxu0 %v798
  %v884 = vpop.f32.mrb[0].mxu0
  %v885 = vadd.f32 0.0, %v884
  %v886 = vpop.f32.mrb[0].mxu0
  %v887 = vpop.f32.mrb[0].mxu0
  %v888 = vadd.f32 0.0, %v887
  %v889 = vpop.f32.mrb[0].mxu0
  %890 = vmatprep.mubr.bf16.mxu0 %v828
  %891 = vmatmul.mubr.bf16.gmra.mrb[0].mxu0 %v799
  %v892 = vpop.f32.mrb[0].mxu0
  %v893 = vadd.f32 0.0, %v892
  %v894 = vpop.f32.mrb[0].mxu0
  %v895 = vpop.f32.mrb[0].mxu0
  %v896 = vadd.f32 0.0, %v895
  %v897 = vpop.f32.mrb[0].mxu0
  %898 = vmatprep.mubr.bf16.mxu0 %v831
  %899 = vmatmul.mubr.bf16.gmra.mrb[0].mxu0 %v800
  %v900 = vpop.f32.mrb[0].mxu0
  %v901 = vadd.f32 0.0, %v900
  %v902 = vpop.f32.mrb[0].mxu0
  %v903 = vpop.f32.mrb[0].mxu0
  %v904 = vadd.f32 0.0, %v903
  %v905 = vpop.f32.mrb[0].mxu0
  %906 = vmatprep.mubr.bf16.mxu0 %v834
  %907 = vmatmul.mubr.bf16.gmra.mrb[0].mxu0 %v801
  %v908 = vpop.f32.mrb[0].mxu0
  %v909 = vadd.f32 0.0, %v908
  %v910 = vpop.f32.mrb[0].mxu0
  %v911 = vpop.f32.mrb[0].mxu0
  %v912 = vadd.f32 0.0, %v911
  %v913 = vpop.f32.mrb[0].mxu0
  %914 = vmatprep.mubr.bf16.mxu0 %v837
  %915 = vmatmul.mubr.bf16.gmra.mrb[0].mxu0 %v802
  %v916 = vpop.f32.mrb[0].mxu0
  %v917 = vadd.f32 0.0, %v916
  %v918 = vpop.f32.mrb[0].mxu0
  %v919 = vpop.f32.mrb[0].mxu0
  %v920 = vadd.f32 0.0, %v919
  %v921 = vpop.f32.mrb[0].mxu0
  %922 = vmatprep.mubr.bf16.mxu0 %v840
  %923 = vmatmul.mubr.bf16.gmra.mrb[0].mxu0 %v803
  %v924 = vpop.f32.mrb[0].mxu0
  %v925 = vadd.f32 0.0, %v924
  %v926 = vpop.f32.mrb[0].mxu0
  %v927 = vpop.f32.mrb[0].mxu0
  %v928 = vpop.f32.mrb[0].mxu0
  %929 = vdwg.mxu0
  %930 = vmatprep.subr.bf16.mxu0 0
  %931 = vmatpush1.bf16.msra.mxu0 %v453
  %932 = vmatprep.subr.bf16.mxu0 0
  %933 = vmatpush1.bf16.msra.mxu0 %v454
  %934 = vmatprep.subr.bf16.mxu0 0
  %935 = vmatpush1.bf16.msra.mxu0 %v455
  %936 = vmatprep.subr.bf16.mxu0 0
  %937 = vmatpush1.bf16.msra.mxu0 %v456
  %938 = vmatprep.subr.bf16.mxu0 0
  %939 = vmatpush1.bf16.msra.mxu0 %v457
  %940 = vmatprep.subr.bf16.mxu0 0
  %941 = vmatpush1.bf16.msra.mxu0 %v458
  %942 = vmatprep.subr.bf16.mxu0 0
  %943 = vmatpush1.bf16.msra.mxu0 %v459
  %944 = vmatprep.subr.bf16.mxu0 0
  %945 = vmatpush1.bf16.msra.mxu0 %v460
  %946 = vmatprep.subr.bf16.mxu0 0
  %947 = vmatpush1.bf16.msra.mxu0 %v461
  %948 = vmatprep.subr.bf16.mxu0 0
  %949 = vmatpush1.bf16.msra.mxu0 %v462
  %950 = vmatprep.subr.bf16.mxu0 0
  %951 = vmatpush1.bf16.msra.mxu0 %v463
  %952 = vmatprep.subr.bf16.mxu0 0
  %953 = vmatpush1.bf16.msra.mxu0 %v464
  %954 = vmatprep.subr.bf16.mxu0 0
  %955 = vmatpush1.bf16.msra.mxu0 %v479
  %956 = vmatprep.subr.bf16.mxu0 0
  %957 = vmatpush1.bf16.msra.mxu0 0
  %958 = vmatprep.subr.bf16.mxu0 0
  %959 = vmatpush1.bf16.msra.mxu0 0
  %960 = vmatprep.subr.bf16.mxu0 0
  %961 = vmatpush1.bf16.msra.mxu0 0
  %962 = vmatprep.mubr.bf16.mxu0 %v822
  %963 = vmatmul.mubr.bf16.gmra.mrb[0].mxu0 %v797
  %v964 = vpop.f32.mrb[0].mxu0
  %v965 = vadd.f32 0.0, %v964
  %v966 = vpop.f32.mrb[0].mxu0
  %v967 = vpop.f32.mrb[0].mxu0
  %v968 = vadd.f32 0.0, %v967
  %v969 = vpop.f32.mrb[0].mxu0
  %970 = vmatprep.mubr.bf16.mxu0 %v825
  %971 = vmatmul.mubr.bf16.gmra.mrb[0].mxu0 %v798
  %v972 = vpop.f32.mrb[0].mxu0
  %v973 = vadd.f32 0.0, %v972
  %v974 = vpop.f32.mrb[0].mxu0
  %v975 = vpop.f32.mrb[0].mxu0
  %v976 = vadd.f32 0.0, %v975
  %v977 = vpop.f32.mrb[0].mxu0
  %978 = vmatprep.mubr.bf16.mxu0 %v828
  %979 = vmatmul.mubr.bf16.gmra.mrb[0].mxu0 %v799
  %v980 = vpop.f32.mrb[0].mxu0
  %v981 = vadd.f32 0.0, %v980
  %v982 = vpop.f32.mrb[0].mxu0
  %v983 = vpop.f32.mrb[0].mxu0
  %v984 = vadd.f32 0.0, %v983
  %v985 = vpop.f32.mrb[0].mxu0
  %986 = vmatprep.mubr.bf16.mxu0 %v831
  %987 = vmatmul.mubr.bf16.gmra.mrb[0].mxu0 %v800
  %v988 = vpop.f32.mrb[0].mxu0
  %v989 = vadd.f32 0.0, %v988
  %v990 = vpop.f32.mrb[0].mxu0
  %v991 = vpop.f32.mrb[0].mxu0
  %v992 = vadd.f32 0.0, %v991
  %v993 = vpop.f32.mrb[0].mxu0
  %994 = vmatprep.mubr.bf16.mxu0 %v834
  %995 = vmatmul.mubr.bf16.gmra.mrb[0].mxu0 %v801
  %v996 = vpop.f32.mrb[0].mxu0
  %v997 = vadd.f32 0.0, %v996
  %v998 = vpop.f32.mrb[0].mxu0
  %v999 = vpop.f32.mrb[0].mxu0
  %v1000 = vadd.f32 0.0, %v999
  %v1001 = vpop.f32.mrb[0].mxu0
  %1002 = vmatprep.mubr.bf16.mxu0 %v837
  %1003 = vmatmul.mubr.bf16.gmra.mrb[0].mxu0 %v802
  %v1004 = vpop.f32.mrb[0].mxu0
  %v1005 = vadd.f32 0.0, %v1004
  %v1006 = vpop.f32.mrb[0].mxu0
  %v1007 = vpop.f32.mrb[0].mxu0
  %v1008 = vadd.f32 0.0, %v1007
  %v1009 = vpop.f32.mrb[0].mxu0
  %1010 = vmatprep.mubr.bf16.mxu0 %v840
  %1011 = vmatmul.mubr.bf16.gmra.mrb[0].mxu0 %v803
  %v1012 = vpop.f32.mrb[0].mxu0
  %v1013 = vadd.f32 0.0, %v1012
  %v1014 = vpop.f32.mrb[0].mxu0
  %v1015 = vpop.f32.mrb[0].mxu0
  %v1016 = vpop.f32.mrb[0].mxu0
  %1017 = vdwg.mxu0
  %v1031 = vrot.slane %v965, 1
  %v1032 = vrot.slane %v968, 1
  %v1033 = vsel %vm582, %v1031, %v1032
  %v1034 = vrot.slane %v973, 1
  %v1035 = vsel %vm582, %v1032, %v1034
  %v1036 = vrot.slane %v976, 1
  %v1037 = vsel %vm582, %v1034, %v1036
  %v1038 = vrot.slane %v981, 1
  %v1039 = vsel %vm582, %v1036, %v1038
  %v1040 = vrot.slane %v984, 1
  %v1041 = vsel %vm582, %v1038, %v1040
  %v1042 = vrot.slane %v989, 1
  %v1043 = vsel %vm582, %v1040, %v1042
  %v1044 = vrot.slane %v992, 1
  %v1045 = vsel %vm582, %v1042, %v1044
  %v1046 = vrot.slane %v997, 1
  %v1047 = vsel %vm582, %v1044, %v1046
  %v1048 = vrot.slane %v1000, 1
  %v1049 = vsel %vm582, %v1046, %v1048
  %v1050 = vrot.slane %v1005, 1
  %v1051 = vsel %vm582, %v1048, %v1050
  %v1052 = vrot.slane %v1008, 1
  %v1053 = vsel %vm582, %v1050, %v1052
  %v1054 = vrot.slane %v1013, 1
  %v1055 = vsel %vm582, %v1052, %v1054
  %v1069 = vadd.f32 %v877, %v1033
  %v1070 = vadd.f32 %v880, %v1035
  %v1071 = vadd.f32 %v885, %v1037
  %v1072 = vadd.f32 %v888, %v1039
  %v1073 = vadd.f32 %v893, %v1041
  %v1074 = vadd.f32 %v896, %v1043
  %v1075 = vadd.f32 %v901, %v1045
  %v1076 = vadd.f32 %v904, %v1047
  %v1077 = vadd.f32 %v909, %v1049
  %v1078 = vadd.f32 %v912, %v1051
  %v1079 = vadd.f32 %v917, %v1053
  %v1080 = vadd.f32 %v920, %v1055
  %v1081 = vadd.f32 %v925, %v1054
  %v1082 = vadd.f32 %v1069, %v638
  %v1083 = vadd.f32 %v1070, %v638
  %v1084 = vadd.f32 %v1071, %v638
  %v1085 = vadd.f32 %v1072, %v638
  %v1086 = vadd.f32 %v1073, %v638
  %v1087 = vadd.f32 %v1074, %v638
  %v1088 = vadd.f32 %v1075, %v638
  %v1089 = vadd.f32 %v1076, %v638
  %v1090 = vadd.f32 %v1077, %v638
  %v1091 = vadd.f32 %v1078, %v638
  %v1092 = vadd.f32 %v1079, %v638
  %v1093 = vadd.f32 %v1080, %v638
  %v1094 = vadd.f32 %v1081, %v638
  %v1095 = vmax.f32 %v1082, 0.0
  %v1096 = vmax.f32 %v1083, 0.0
  %v1097 = vmax.f32 %v1084, 0.0
  %v1098 = vmax.f32 %v1085, 0.0
  %v1099 = vmax.f32 %v1086, 0.0
  %v1100 = vmax.f32 %v1087, 0.0
  %v1101 = vmax.f32 %v1088, 0.0
  %v1102 = vmax.f32 %v1089, 0.0
  %v1103 = vmax.f32 %v1090, 0.0
  %v1104 = vmax.f32 %v1091, 0.0
  %v1105 = vmax.f32 %v1092, 0.0
  %v1106 = vmax.f32 %v1093, 0.0
  %v1107 = vmax.f32 %v1094, 0.0
  %v1108 = vmax.f32 %v1095, %v1099
  %v1109 = vmax.f32 %v1096, %v1100
  %v1110 = vmax.f32 %v1097, %v1101
  %v1111 = vmax.f32 %v1098, %v1102
  %v1112 = vmax.f32 %v1108, %v1103
  %v1113 = vmax.f32 %v1109, %v1104
  %v1114 = vmax.f32 %v1110, %v1105
  %v1115 = vmax.f32 %v1111, %v1106
  %v1116 = vsel %vm674, %v1107, -inf
  %v1117 = vmax.f32 %v1112, %v1116
  %v1118 = vmax.f32 %v1117, %v1113
  %v1119 = vmax.f32 %v1114, %v1115
  %v1120 = vmax.f32 %v1118, %v1119
  %v1121 = vrot.slane %v1120, 4
  %v1122 = vmax.f32 %v1120, %v1121
  %v1123 = vrot.slane %v1122, 2
  %v1124 = vmax.f32 %v1122, %v1123
  %v1125 = vrot.slane %v1124, 1
  %v1126 = vmax.f32 %v1124, %v1125
  %1127 = vst [vmem:[#allocation2 + $0x1] sm:$0x1] %v1126
  %v1128 = vld [vmem:[#allocation2] sm:$0x3]
  %v1129 = vld [vmem:[%s4] sm:$0xff]
  %v1130 = vld [vmem:[%s4 + $0x8] sm:$0xff]
  %v1131 = vld [vmem:[%s4 + $0x10] sm:$0xff]
  %v1132 = vld [vmem:[%s4 + $0x18] sm:$0xff]
  %v1133 = vld [vmem:[%s4 + $0x20] sm:$0xff]
  %v1134 = vld [vmem:[%s4 + $0x28] sm:$0xff]
  %v1135 = vld [vmem:[%s4 + $0x30] sm:$0xff]
  %v1136 = vld [vmem:[%s4 + $0x38] sm:$0xff]
  %v1137 = vld [vmem:[%s4 + $0x40] sm:$0xff]
  %v1138 = vld [vmem:[%s4 + $0x48] sm:$0xff]
  %v1139 = vld [vmem:[%s4 + $0x50] sm:$0xff]
  %v1140 = vld [vmem:[%s4 + $0x58] sm:$0xff]
  %v1141 = vld [vmem:[%s4 + $0x60] sm:$0xff]
  %v1142 = vld [vmem:[%s4 + $0x68] sm:$0xff]
  %v1143 = vld [vmem:[%s4 + $0x70] sm:$0xff]
  %v1144 = vld [vmem:[%s4 + $0x78] sm:$0xff]
  %v1145 = vld [vmem:[%s5] sm:$0x1]
  %v1147 = vlaneseq
  %v1148 = vshrl.u32 %v1147, 7
  %v1149 = vsub.s32 0, %v1148
  %v1150 = vrot.slane %v1145, %v1149
  %1152 = vmatprep.subr.mxu0 0.0
  %v1153 = vand.u32 %v1129, 4294901760
  %1154 = vmatpush1.msra.mxu0 %v1153
  %1155 = vmatprep.subr.mxu0 0.0
  %v1156 = vand.u32 %v1130, 4294901760
  %1157 = vmatpush1.msra.mxu0 %v1156
  %1158 = vmatprep.subr.mxu0 0.0
  %v1159 = vand.u32 %v1131, 4294901760
  %1160 = vmatpush1.msra.mxu0 %v1159
  %1161 = vmatprep.subr.mxu0 0.0
  %v1162 = vand.u32 %v1132, 4294901760
  %1163 = vmatpush1.msra.mxu0 %v1162
  %1164 = vmatprep.subr.mxu0 0.0
  %v1165 = vand.u32 %v1133, 4294901760
  %1166 = vmatpush1.msra.mxu0 %v1165
  %1167 = vmatprep.subr.mxu0 0.0
  %v1168 = vand.u32 %v1134, 4294901760
  %1169 = vmatpush1.msra.mxu0 %v1168
  %1170 = vmatprep.subr.mxu0 0.0
  %v1171 = vand.u32 %v1135, 4294901760
  %1172 = vmatpush1.msra.mxu0 %v1171
  %1173 = vmatprep.subr.mxu0 0.0
  %v1174 = vand.u32 %v1136, 4294901760
  %1175 = vmatpush1.msra.mxu0 %v1174
  %1176 = vmatprep.subr.mxu0 0.0
  %v1177 = vand.u32 %v1137, 4294901760
  %1178 = vmatpush1.msra.mxu0 %v1177
  %1179 = vmatprep.subr.mxu0 0.0
  %v1180 = vand.u32 %v1138, 4294901760
  %1181 = vmatpush1.msra.mxu0 %v1180
  %1182 = vmatprep.subr.mxu0 0.0
  %v1183 = vand.u32 %v1139, 4294901760
  %1184 = vmatpush1.msra.mxu0 %v1183
  %1185 = vmatprep.subr.mxu0 0.0
  %v1186 = vand.u32 %v1140, 4294901760
  %1187 = vmatpush1.msra.mxu0 %v1186
  %1188 = vmatprep.subr.mxu0 0.0
  %v1189 = vand.u32 %v1141, 4294901760
  %1190 = vmatpush1.msra.mxu0 %v1189
  %1191 = vmatprep.subr.mxu0 0.0
  %v1192 = vand.u32 %v1142, 4294901760
  %1193 = vmatpush1.msra.mxu0 %v1192
  %1194 = vmatprep.subr.mxu0 0.0
  %v1195 = vand.u32 %v1143, 4294901760
  %1196 = vmatpush1.msra.mxu0 %v1195
  %1197 = vmatprep.subr.mxu0 0.0
  %v1198 = vand.u32 %v1144, 4294901760
  %1199 = vmatpush1.msra.mxu0 %v1198
  %1200 = vmatprep.subr.mxu0 0.0
  %1201 = vmatpush1.msra.mxu0 0.0
  %1202 = vmatprep.subr.mxu0 0.0
  %1203 = vmatpush1.msra.mxu0 0.0
  %1204 = vmatprep.subr.mxu0 0.0
  %1205 = vmatpush1.msra.mxu0 0.0
  %1206 = vmatprep.subr.mxu0 0.0
  %1207 = vmatpush1.msra.mxu0 0.0
  %1208 = vmatprep.subr.mxu0 0.0
  %1209 = vmatpush1.msra.mxu0 0.0
  %1210 = vmatprep.subr.mxu0 0.0
  %1211 = vmatpush1.msra.mxu0 0.0
  %1212 = vmatprep.subr.mxu0 0.0
  %1213 = vmatpush1.msra.mxu0 0.0
  %1214 = vmatprep.subr.mxu0 0.0
  %1215 = vmatpush1.msra.mxu0 0.0
  %1216 = vmatprep.subr.mxu0 0.0
  %1217 = vmatpush1.msra.mxu0 0.0
  %1218 = vmatprep.subr.mxu0 0.0
  %1219 = vmatpush1.msra.mxu0 0.0
  %1220 = vmatprep.subr.mxu0 0.0
  %1221 = vmatpush1.msra.mxu0 0.0
  %1222 = vmatprep.subr.mxu0 0.0
  %1223 = vmatpush1.msra.mxu0 0.0
  %1224 = vmatprep.subr.mxu0 0.0
  %1225 = vmatpush1.msra.mxu0 0.0
  %1226 = vmatprep.subr.mxu0 0.0
  %1227 = vmatpush1.msra.mxu0 0.0
  %1228 = vmatprep.subr.mxu0 0.0
  %1229 = vmatpush1.msra.mxu0 0.0
  %1230 = vmatprep.subr.mxu0 0.0
  %1231 = vmatpush1.msra.mxu0 0.0
  %1232 = vmatprep.mubr.f32.mxu0 0.0
  %v1233 = vand.u32 %v1128, 4294901760
  %v1234 = vsub.f32 %v1128, %v1233
  %v1235 = vand.u32 %v1234, 4294901760
  %v1236 = vsub.f32 %v1234, %v1235
  %v1237 = vand.u32 %v1236, 4294901760
  %1238 = vmatmul.mubr.f32.gmra.mrb[0].mxu0 %v1237
  %v1239 = vpop.f32.mrb[0].mxu0
  %v1240 = vadd.f32 %v1150, %v1239
  %v1241 = vpop.f32.mrb[0].mxu0
  %1242 = vdwg.mxu0
  %1243 = vmatprep.subr.mxu0 0.0
  %v1244 = vand.u32 %v1129, 4294901760
  %v1245 = vsub.f32 %v1129, %v1244
  %v1246 = vand.u32 %v1245, 4294901760
  %v1247 = vsub.f32 %v1245, %v1246
  %v1248 = vand.u32 %v1247, 4294901760
  %1249 = vmatpush1.msra.mxu0 %v1248
  %1250 = vmatprep.subr.mxu0 0.0
  %v1251 = vand.u32 %v1130, 4294901760
  %v1252 = vsub.f32 %v1130, %v1251
  %v1253 = vand.u32 %v1252, 4294901760
  %v1254 = vsub.f32 %v1252, %v1253
  %v1255 = vand.u32 %v1254, 4294901760
  %1256 = vmatpush1.msra.mxu0 %v1255
  %1257 = vmatprep.subr.mxu0 0.0
  %v1258 = vand.u32 %v1131, 4294901760
  %v1259 = vsub.f32 %v1131, %v1258
  %v1260 = vand.u32 %v1259, 4294901760
  %v1261 = vsub.f32 %v1259, %v1260
  %v1262 = vand.u32 %v1261, 4294901760
  %1263 = vmatpush1.msra.mxu0 %v1262
  %1264 = vmatprep.subr.mxu0 0.0
  %v1265 = vand.u32 %v1132, 4294901760
  %v1266 = vsub.f32 %v1132, %v1265
  %v1267 = vand.u32 %v1266, 4294901760
  %v1268 = vsub.f32 %v1266, %v1267
  %v1269 = vand.u32 %v1268, 4294901760
  %1270 = vmatpush1.msra.mxu0 %v1269
  %1271 = vmatprep.subr.mxu0 0.0
  %v1272 = vand.u32 %v1133, 4294901760
  %v1273 = vsub.f32 %v1133, %v1272
  %v1274 = vand.u32 %v1273, 4294901760
  %v1275 = vsub.f32 %v1273, %v1274
  %v1276 = vand.u32 %v1275, 4294901760
  %1277 = vmatpush1.msra.mxu0 %v1276
  %1278 = vmatprep.subr.mxu0 0.0
  %v1279 = vand.u32 %v1134, 4294901760
  %v1280 = vsub.f32 %v1134, %v1279
  %v1281 = vand.u32 %v1280, 4294901760
  %v1282 = vsub.f32 %v1280, %v1281
  %v1283 = vand.u32 %v1282, 4294901760
  %1284 = vmatpush1.msra.mxu0 %v1283
  %1285 = vmatprep.subr.mxu0 0.0
  %v1286 = vand.u32 %v1135, 4294901760
  %v1287 = vsub.f32 %v1135, %v1286
  %v1288 = vand.u32 %v1287, 4294901760
  %v1289 = vsub.f32 %v1287, %v1288
  %v1290 = vand.u32 %v1289, 4294901760
  %1291 = vmatpush1.msra.mxu0 %v1290
  %1292 = vmatprep.subr.mxu0 0.0
  %v1293 = vand.u32 %v1136, 4294901760
  %v1294 = vsub.f32 %v1136, %v1293
  %v1295 = vand.u32 %v1294, 4294901760
  %v1296 = vsub.f32 %v1294, %v1295
  %v1297 = vand.u32 %v1296, 4294901760
  %1298 = vmatpush1.msra.mxu0 %v1297
  %1299 = vmatprep.subr.mxu0 0.0
  %v1300 = vand.u32 %v1137, 4294901760
  %v1301 = vsub.f32 %v1137, %v1300
  %v1302 = vand.u32 %v1301, 4294901760
  %v1303 = vsub.f32 %v1301, %v1302
  %v1304 = vand.u32 %v1303, 4294901760
  %1305 = vmatpush1.msra.mxu0 %v1304
  %1306 = vmatprep.subr.mxu0 0.0
  %v1307 = vand.u32 %v1138, 4294901760
  %v1308 = vsub.f32 %v1138, %v1307
  %v1309 = vand.u32 %v1308, 4294901760
  %v1310 = vsub.f32 %v1308, %v1309
  %v1311 = vand.u32 %v1310, 4294901760
  %1312 = vmatpush1.msra.mxu0 %v1311
  %1313 = vmatprep.subr.mxu0 0.0
  %v1314 = vand.u32 %v1139, 4294901760
  %v1315 = vsub.f32 %v1139, %v1314
  %v1316 = vand.u32 %v1315, 4294901760
  %v1317 = vsub.f32 %v1315, %v1316
  %v1318 = vand.u32 %v1317, 4294901760
  %1319 = vmatpush1.msra.mxu0 %v1318
  %1320 = vmatprep.subr.mxu0 0.0
  %v1321 = vand.u32 %v1140, 4294901760
  %v1322 = vsub.f32 %v1140, %v1321
  %v1323 = vand.u32 %v1322, 4294901760
  %v1324 = vsub.f32 %v1322, %v1323
  %v1325 = vand.u32 %v1324, 4294901760
  %1326 = vmatpush1.msra.mxu0 %v1325
  %1327 = vmatprep.subr.mxu0 0.0
  %v1328 = vand.u32 %v1141, 4294901760
  %v1329 = vsub.f32 %v1141, %v1328
  %v1330 = vand.u32 %v1329, 4294901760
  %v1331 = vsub.f32 %v1329, %v1330
  %v1332 = vand.u32 %v1331, 4294901760
  %1333 = vmatpush1.msra.mxu0 %v1332
  %1334 = vmatprep.subr.mxu0 0.0
  %v1335 = vand.u32 %v1142, 4294901760
  %v1336 = vsub.f32 %v1142, %v1335
  %v1337 = vand.u32 %v1336, 4294901760
  %v1338 = vsub.f32 %v1336, %v1337
  %v1339 = vand.u32 %v1338, 4294901760
  %1340 = vmatpush1.msra.mxu0 %v1339
  %1341 = vmatprep.subr.mxu0 0.0
  %v1342 = vand.u32 %v1143, 4294901760
  %v1343 = vsub.f32 %v1143, %v1342
  %v1344 = vand.u32 %v1343, 4294901760
  %v1345 = vsub.f32 %v1343, %v1344
  %v1346 = vand.u32 %v1345, 4294901760
  %1347 = vmatpush1.msra.mxu0 %v1346
  %1348 = vmatprep.subr.mxu0 0.0
  %v1349 = vand.u32 %v1144, 4294901760
  %v1350 = vsub.f32 %v1144, %v1349
  %v1351 = vand.u32 %v1350, 4294901760
  %v1352 = vsub.f32 %v1350, %v1351
  %v1353 = vand.u32 %v1352, 4294901760
  %1354 = vmatpush1.msra.mxu0 %v1353
  %1355 = vmatprep.subr.mxu0 0.0
  %1356 = vmatpush1.msra.mxu0 0.0
  %1357 = vmatprep.subr.mxu0 0.0
  %1358 = vmatpush1.msra.mxu0 0.0
  %1359 = vmatprep.subr.mxu0 0.0
  %1360 = vmatpush1.msra.mxu0 0.0
  %1361 = vmatprep.subr.mxu0 0.0
  %1362 = vmatpush1.msra.mxu0 0.0
  %1363 = vmatprep.subr.mxu0 0.0
  %1364 = vmatpush1.msra.mxu0 0.0
  %1365 = vmatprep.subr.mxu0 0.0
  %1366 = vmatpush1.msra.mxu0 0.0
  %1367 = vmatprep.subr.mxu0 0.0
  %1368 = vmatpush1.msra.mxu0 0.0
  %1369 = vmatprep.subr.mxu0 0.0
  %1370 = vmatpush1.msra.mxu0 0.0
  %1371 = vmatprep.subr.mxu0 0.0
  %1372 = vmatpush1.msra.mxu0 0.0
  %1373 = vmatprep.subr.mxu0 0.0
  %1374 = vmatpush1.msra.mxu0 0.0
  %1375 = vmatprep.subr.mxu0 0.0
  %1376 = vmatpush1.msra.mxu0 0.0
  %1377 = vmatprep.subr.mxu0 0.0
  %1378 = vmatpush1.msra.mxu0 0.0
  %1379 = vmatprep.subr.mxu0 0.0
  %1380 = vmatpush1.msra.mxu0 0.0
  %1381 = vmatprep.subr.mxu0 0.0
  %1382 = vmatpush1.msra.mxu0 0.0
  %1383 = vmatprep.subr.mxu0 0.0
  %1384 = vmatpush1.msra.mxu0 0.0
  %1385 = vmatprep.subr.mxu0 0.0
  %1386 = vmatpush1.msra.mxu0 0.0
  %1387 = vmatprep.mubr.f32.mxu0 0.0
  %v1388 = vand.u32 %v1128, 4294901760
  %1389 = vmatmul.mubr.f32.gmra.mrb[0].mxu0 %v1388
  %v1390 = vpop.f32.mrb[0].mxu0
  %v1391 = vadd.f32 %v1240, %v1390
  %v1392 = vpop.f32.mrb[0].mxu0
  %1393 = vdwg.mxu0
  %1394 = vmatprep.subr.mxu0 0.0
  %v1395 = vand.u32 %v1129, 4294901760
  %v1396 = vsub.f32 %v1129, %v1395
  %1397 = vmatpush1.msra.mxu0 %v1396
  %1398 = vmatprep.subr.mxu0 0.0
  %v1399 = vand.u32 %v1130, 4294901760
  %v1400 = vsub.f32 %v1130, %v1399
  %1401 = vmatpush1.msra.mxu0 %v1400
  %1402 = vmatprep.subr.mxu0 0.0
  %v1403 = vand.u32 %v1131, 4294901760
  %v1404 = vsub.f32 %v1131, %v1403
  %1405 = vmatpush1.msra.mxu0 %v1404
  %1406 = vmatprep.subr.mxu0 0.0
  %v1407 = vand.u32 %v1132, 4294901760
  %v1408 = vsub.f32 %v1132, %v1407
  %1409 = vmatpush1.msra.mxu0 %v1408
  %1410 = vmatprep.subr.mxu0 0.0
  %v1411 = vand.u32 %v1133, 4294901760
  %v1412 = vsub.f32 %v1133, %v1411
  %1413 = vmatpush1.msra.mxu0 %v1412
  %1414 = vmatprep.subr.mxu0 0.0
  %v1415 = vand.u32 %v1134, 4294901760
  %v1416 = vsub.f32 %v1134, %v1415
  %1417 = vmatpush1.msra.mxu0 %v1416
  %1418 = vmatprep.subr.mxu0 0.0
  %v1419 = vand.u32 %v1135, 4294901760
  %v1420 = vsub.f32 %v1135, %v1419
  %1421 = vmatpush1.msra.mxu0 %v1420
  %1422 = vmatprep.subr.mxu0 0.0
  %v1423 = vand.u32 %v1136, 4294901760
  %v1424 = vsub.f32 %v1136, %v1423
  %1425 = vmatpush1.msra.mxu0 %v1424
  %1426 = vmatprep.subr.mxu0 0.0
  %v1427 = vand.u32 %v1137, 4294901760
  %v1428 = vsub.f32 %v1137, %v1427
  %1429 = vmatpush1.msra.mxu0 %v1428
  %1430 = vmatprep.subr.mxu0 0.0
  %v1431 = vand.u32 %v1138, 4294901760
  %v1432 = vsub.f32 %v1138, %v1431
  %1433 = vmatpush1.msra.mxu0 %v1432
  %1434 = vmatprep.subr.mxu0 0.0
  %v1435 = vand.u32 %v1139, 4294901760
  %v1436 = vsub.f32 %v1139, %v1435
  %1437 = vmatpush1.msra.mxu0 %v1436
  %1438 = vmatprep.subr.mxu0 0.0
  %v1439 = vand.u32 %v1140, 4294901760
  %v1440 = vsub.f32 %v1140, %v1439
  %1441 = vmatpush1.msra.mxu0 %v1440
  %1442 = vmatprep.subr.mxu0 0.0
  %v1443 = vand.u32 %v1141, 4294901760
  %v1444 = vsub.f32 %v1141, %v1443
  %1445 = vmatpush1.msra.mxu0 %v1444
  %1446 = vmatprep.subr.mxu0 0.0
  %v1447 = vand.u32 %v1142, 4294901760
  %v1448 = vsub.f32 %v1142, %v1447
  %1449 = vmatpush1.msra.mxu0 %v1448
  %1450 = vmatprep.subr.mxu0 0.0
  %v1451 = vand.u32 %v1143, 4294901760
  %v1452 = vsub.f32 %v1143, %v1451
  %1453 = vmatpush1.msra.mxu0 %v1452
  %1454 = vmatprep.subr.mxu0 0.0
  %v1455 = vand.u32 %v1144, 4294901760
  %v1456 = vsub.f32 %v1144, %v1455
  %1457 = vmatpush1.msra.mxu0 %v1456
  %1458 = vmatprep.subr.mxu0 0.0
  %1459 = vmatpush1.msra.mxu0 0.0
  %1460 = vmatprep.subr.mxu0 0.0
  %1461 = vmatpush1.msra.mxu0 0.0
  %1462 = vmatprep.subr.mxu0 0.0
  %1463 = vmatpush1.msra.mxu0 0.0
  %1464 = vmatprep.subr.mxu0 0.0
  %1465 = vmatpush1.msra.mxu0 0.0
  %1466 = vmatprep.subr.mxu0 0.0
  %1467 = vmatpush1.msra.mxu0 0.0
  %1468 = vmatprep.subr.mxu0 0.0
  %1469 = vmatpush1.msra.mxu0 0.0
  %1470 = vmatprep.subr.mxu0 0.0
  %1471 = vmatpush1.msra.mxu0 0.0
  %1472 = vmatprep.subr.mxu0 0.0
  %1473 = vmatpush1.msra.mxu0 0.0
  %1474 = vmatprep.subr.mxu0 0.0
  %1475 = vmatpush1.msra.mxu0 0.0
  %1476 = vmatprep.subr.mxu0 0.0
  %1477 = vmatpush1.msra.mxu0 0.0
  %1478 = vmatprep.subr.mxu0 0.0
  %1479 = vmatpush1.msra.mxu0 0.0
  %1480 = vmatprep.subr.mxu0 0.0
  %1481 = vmatpush1.msra.mxu0 0.0
  %1482 = vmatprep.subr.mxu0 0.0
  %1483 = vmatpush1.msra.mxu0 0.0
  %1484 = vmatprep.subr.mxu0 0.0
  %1485 = vmatpush1.msra.mxu0 0.0
  %1486 = vmatprep.subr.mxu0 0.0
  %1487 = vmatpush1.msra.mxu0 0.0
  %1488 = vmatprep.subr.mxu0 0.0
  %1489 = vmatpush1.msra.mxu0 0.0
  %1490 = vmatprep.mubr.f32.mxu0 0.0
  %v1491 = vand.u32 %v1128, 4294901760
  %v1492 = vsub.f32 %v1128, %v1491
  %1493 = vmatmul.mubr.f32.gmra.mrb[0].mxu0 %v1492
  %v1494 = vpop.f32.mrb[0].mxu0
  %v1495 = vadd.f32 %v1391, %v1494
  %v1496 = vpop.f32.mrb[0].mxu0
  %1497 = vdwg.mxu0
  %1498 = vmatprep.subr.mxu0 0.0
  %v1499 = vand.u32 %v1129, 4294901760
  %1500 = vmatpush1.msra.mxu0 %v1499
  %1501 = vmatprep.subr.mxu0 0.0
  %v1502 = vand.u32 %v1130, 4294901760
  %1503 = vmatpush1.msra.mxu0 %v1502
  %1504 = vmatprep.subr.mxu0 0.0
  %v1505 = vand.u32 %v1131, 4294901760
  %1506 = vmatpush1.msra.mxu0 %v1505
  %1507 = vmatprep.subr.mxu0 0.0
  %v1508 = vand.u32 %v1132, 4294901760
  %1509 = vmatpush1.msra.mxu0 %v1508
  %1510 = vmatprep.subr.mxu0 0.0
  %v1511 = vand.u32 %v1133, 4294901760
  %1512 = vmatpush1.msra.mxu0 %v1511
  %1513 = vmatprep.subr.mxu0 0.0
  %v1514 = vand.u32 %v1134, 4294901760
  %1515 = vmatpush1.msra.mxu0 %v1514
  %1516 = vmatprep.subr.mxu0 0.0
  %v1517 = vand.u32 %v1135, 4294901760
  %1518 = vmatpush1.msra.mxu0 %v1517
  %1519 = vmatprep.subr.mxu0 0.0
  %v1520 = vand.u32 %v1136, 4294901760
  %1521 = vmatpush1.msra.mxu0 %v1520
  %1522 = vmatprep.subr.mxu0 0.0
  %v1523 = vand.u32 %v1137, 4294901760
  %1524 = vmatpush1.msra.mxu0 %v1523
  %1525 = vmatprep.subr.mxu0 0.0
  %v1526 = vand.u32 %v1138, 4294901760
  %1527 = vmatpush1.msra.mxu0 %v1526
  %1528 = vmatprep.subr.mxu0 0.0
  %v1529 = vand.u32 %v1139, 4294901760
  %1530 = vmatpush1.msra.mxu0 %v1529
  %1531 = vmatprep.subr.mxu0 0.0
  %v1532 = vand.u32 %v1140, 4294901760
  %1533 = vmatpush1.msra.mxu0 %v1532
  %1534 = vmatprep.subr.mxu0 0.0
  %v1535 = vand.u32 %v1141, 4294901760
  %1536 = vmatpush1.msra.mxu0 %v1535
  %1537 = vmatprep.subr.mxu0 0.0
  %v1538 = vand.u32 %v1142, 4294901760
  %1539 = vmatpush1.msra.mxu0 %v1538
  %1540 = vmatprep.subr.mxu0 0.0
  %v1541 = vand.u32 %v1143, 4294901760
  %1542 = vmatpush1.msra.mxu0 %v1541
  %1543 = vmatprep.subr.mxu0 0.0
  %v1544 = vand.u32 %v1144, 4294901760
  %1545 = vmatpush1.msra.mxu0 %v1544
  %1546 = vmatprep.subr.mxu0 0.0
  %1547 = vmatpush1.msra.mxu0 0.0
  %1548 = vmatprep.subr.mxu0 0.0
  %1549 = vmatpush1.msra.mxu0 0.0
  %1550 = vmatprep.subr.mxu0 0.0
  %1551 = vmatpush1.msra.mxu0 0.0
  %1552 = vmatprep.subr.mxu0 0.0
  %1553 = vmatpush1.msra.mxu0 0.0
  %1554 = vmatprep.subr.mxu0 0.0
  %1555 = vmatpush1.msra.mxu0 0.0
  %1556 = vmatprep.subr.mxu0 0.0
  %1557 = vmatpush1.msra.mxu0 0.0
  %1558 = vmatprep.subr.mxu0 0.0
  %1559 = vmatpush1.msra.mxu0 0.0
  %1560 = vmatprep.subr.mxu0 0.0
  %1561 = vmatpush1.msra.mxu0 0.0
  %1562 = vmatprep.subr.mxu0 0.0
  %1563 = vmatpush1.msra.mxu0 0.0
  %1564 = vmatprep.subr.mxu0 0.0
  %1565 = vmatpush1.msra.mxu0 0.0
  %1566 = vmatprep.subr.mxu0 0.0
  %1567 = vmatpush1.msra.mxu0 0.0
  %1568 = vmatprep.subr.mxu0 0.0
  %1569 = vmatpush1.msra.mxu0 0.0
  %1570 = vmatprep.subr.mxu0 0.0
  %1571 = vmatpush1.msra.mxu0 0.0
  %1572 = vmatprep.subr.mxu0 0.0
  %1573 = vmatpush1.msra.mxu0 0.0
  %1574 = vmatprep.subr.mxu0 0.0
  %1575 = vmatpush1.msra.mxu0 0.0
  %1576 = vmatprep.subr.mxu0 0.0
  %1577 = vmatpush1.msra.mxu0 0.0
  %1578 = vmatprep.mubr.f32.mxu0 0.0
  %v1579 = vand.u32 %v1128, 4294901760
  %v1580 = vsub.f32 %v1128, %v1579
  %v1581 = vand.u32 %v1580, 4294901760
  %1582 = vmatmul.mubr.f32.gmra.mrb[0].mxu0 %v1581
  %v1583 = vpop.f32.mrb[0].mxu0
  %v1584 = vadd.f32 %v1495, %v1583
  %v1585 = vpop.f32.mrb[0].mxu0
  %1586 = vdwg.mxu0
  %1587 = vmatprep.subr.mxu0 0.0
  %v1588 = vand.u32 %v1129, 4294901760
  %v1589 = vsub.f32 %v1129, %v1588
  %v1590 = vand.u32 %v1589, 4294901760
  %1591 = vmatpush1.msra.mxu0 %v1590
  %1592 = vmatprep.subr.mxu0 0.0
  %v1593 = vand.u32 %v1130, 4294901760
  %v1594 = vsub.f32 %v1130, %v1593
  %v1595 = vand.u32 %v1594, 4294901760
  %1596 = vmatpush1.msra.mxu0 %v1595
  %1597 = vmatprep.subr.mxu0 0.0
  %v1598 = vand.u32 %v1131, 4294901760
  %v1599 = vsub.f32 %v1131, %v1598
  %v1600 = vand.u32 %v1599, 4294901760
  %1601 = vmatpush1.msra.mxu0 %v1600
  %1602 = vmatprep.subr.mxu0 0.0
  %v1603 = vand.u32 %v1132, 4294901760
  %v1604 = vsub.f32 %v1132, %v1603
  %v1605 = vand.u32 %v1604, 4294901760
  %1606 = vmatpush1.msra.mxu0 %v1605
  %1607 = vmatprep.subr.mxu0 0.0
  %v1608 = vand.u32 %v1133, 4294901760
  %v1609 = vsub.f32 %v1133, %v1608
  %v1610 = vand.u32 %v1609, 4294901760
  %1611 = vmatpush1.msra.mxu0 %v1610
  %1612 = vmatprep.subr.mxu0 0.0
  %v1613 = vand.u32 %v1134, 4294901760
  %v1614 = vsub.f32 %v1134, %v1613
  %v1615 = vand.u32 %v1614, 4294901760
  %1616 = vmatpush1.msra.mxu0 %v1615
  %1617 = vmatprep.subr.mxu0 0.0
  %v1618 = vand.u32 %v1135, 4294901760
  %v1619 = vsub.f32 %v1135, %v1618
  %v1620 = vand.u32 %v1619, 4294901760
  %1621 = vmatpush1.msra.mxu0 %v1620
  %1622 = vmatprep.subr.mxu0 0.0
  %v1623 = vand.u32 %v1136, 4294901760
  %v1624 = vsub.f32 %v1136, %v1623
  %v1625 = vand.u32 %v1624, 4294901760
  %1626 = vmatpush1.msra.mxu0 %v1625
  %1627 = vmatprep.subr.mxu0 0.0
  %v1628 = vand.u32 %v1137, 4294901760
  %v1629 = vsub.f32 %v1137, %v1628
  %v1630 = vand.u32 %v1629, 4294901760
  %1631 = vmatpush1.msra.mxu0 %v1630
  %1632 = vmatprep.subr.mxu0 0.0
  %v1633 = vand.u32 %v1138, 4294901760
  %v1634 = vsub.f32 %v1138, %v1633
  %v1635 = vand.u32 %v1634, 4294901760
  %1636 = vmatpush1.msra.mxu0 %v1635
  %1637 = vmatprep.subr.mxu0 0.0
  %v1638 = vand.u32 %v1139, 4294901760
  %v1639 = vsub.f32 %v1139, %v1638
  %v1640 = vand.u32 %v1639, 4294901760
  %1641 = vmatpush1.msra.mxu0 %v1640
  %1642 = vmatprep.subr.mxu0 0.0
  %v1643 = vand.u32 %v1140, 4294901760
  %v1644 = vsub.f32 %v1140, %v1643
  %v1645 = vand.u32 %v1644, 4294901760
  %1646 = vmatpush1.msra.mxu0 %v1645
  %1647 = vmatprep.subr.mxu0 0.0
  %v1648 = vand.u32 %v1141, 4294901760
  %v1649 = vsub.f32 %v1141, %v1648
  %v1650 = vand.u32 %v1649, 4294901760
  %1651 = vmatpush1.msra.mxu0 %v1650
  %1652 = vmatprep.subr.mxu0 0.0
  %v1653 = vand.u32 %v1142, 4294901760
  %v1654 = vsub.f32 %v1142, %v1653
  %v1655 = vand.u32 %v1654, 4294901760
  %1656 = vmatpush1.msra.mxu0 %v1655
  %1657 = vmatprep.subr.mxu0 0.0
  %v1658 = vand.u32 %v1143, 4294901760
  %v1659 = vsub.f32 %v1143, %v1658
  %v1660 = vand.u32 %v1659, 4294901760
  %1661 = vmatpush1.msra.mxu0 %v1660
  %1662 = vmatprep.subr.mxu0 0.0
  %v1663 = vand.u32 %v1144, 4294901760
  %v1664 = vsub.f32 %v1144, %v1663
  %v1665 = vand.u32 %v1664, 4294901760
  %1666 = vmatpush1.msra.mxu0 %v1665
  %1667 = vmatprep.subr.mxu0 0.0
  %1668 = vmatpush1.msra.mxu0 0.0
  %1669 = vmatprep.subr.mxu0 0.0
  %1670 = vmatpush1.msra.mxu0 0.0
  %1671 = vmatprep.subr.mxu0 0.0
  %1672 = vmatpush1.msra.mxu0 0.0
  %1673 = vmatprep.subr.mxu0 0.0
  %1674 = vmatpush1.msra.mxu0 0.0
  %1675 = vmatprep.subr.mxu0 0.0
  %1676 = vmatpush1.msra.mxu0 0.0
  %1677 = vmatprep.subr.mxu0 0.0
  %1678 = vmatpush1.msra.mxu0 0.0
  %1679 = vmatprep.subr.mxu0 0.0
  %1680 = vmatpush1.msra.mxu0 0.0
  %1681 = vmatprep.subr.mxu0 0.0
  %1682 = vmatpush1.msra.mxu0 0.0
  %1683 = vmatprep.subr.mxu0 0.0
  %1684 = vmatpush1.msra.mxu0 0.0
  %1685 = vmatprep.subr.mxu0 0.0
  %1686 = vmatpush1.msra.mxu0 0.0
  %1687 = vmatprep.subr.mxu0 0.0
  %1688 = vmatpush1.msra.mxu0 0.0
  %1689 = vmatprep.subr.mxu0 0.0
  %1690 = vmatpush1.msra.mxu0 0.0
  %1691 = vmatprep.subr.mxu0 0.0
  %1692 = vmatpush1.msra.mxu0 0.0
  %1693 = vmatprep.subr.mxu0 0.0
  %1694 = vmatpush1.msra.mxu0 0.0
  %1695 = vmatprep.subr.mxu0 0.0
  %1696 = vmatpush1.msra.mxu0 0.0
  %1697 = vmatprep.subr.mxu0 0.0
  %1698 = vmatpush1.msra.mxu0 0.0
  %1699 = vmatprep.mubr.f32.mxu0 0.0
  %v1700 = vand.u32 %v1128, 4294901760
  %1701 = vmatmul.mubr.f32.gmra.mrb[0].mxu0 %v1700
  %v1702 = vpop.f32.mrb[0].mxu0
  %v1703 = vadd.f32 %v1584, %v1702
  %v1704 = vpop.f32.mrb[0].mxu0
  %1705 = vdwg.mxu0
  %1706 = vmatprep.subr.mxu0 0.0
  %v1707 = vand.u32 %v1129, 4294901760
  %1708 = vmatpush1.msra.mxu0 %v1707
  %1709 = vmatprep.subr.mxu0 0.0
  %v1710 = vand.u32 %v1130, 4294901760
  %1711 = vmatpush1.msra.mxu0 %v1710
  %1712 = vmatprep.subr.mxu0 0.0
  %v1713 = vand.u32 %v1131, 4294901760
  %1714 = vmatpush1.msra.mxu0 %v1713
  %1715 = vmatprep.subr.mxu0 0.0
  %v1716 = vand.u32 %v1132, 4294901760
  %1717 = vmatpush1.msra.mxu0 %v1716
  %1718 = vmatprep.subr.mxu0 0.0
  %v1719 = vand.u32 %v1133, 4294901760
  %1720 = vmatpush1.msra.mxu0 %v1719
  %1721 = vmatprep.subr.mxu0 0.0
  %v1722 = vand.u32 %v1134, 4294901760
  %1723 = vmatpush1.msra.mxu0 %v1722
  %1724 = vmatprep.subr.mxu0 0.0
  %v1725 = vand.u32 %v1135, 4294901760
  %1726 = vmatpush1.msra.mxu0 %v1725
  %1727 = vmatprep.subr.mxu0 0.0
  %v1728 = vand.u32 %v1136, 4294901760
  %1729 = vmatpush1.msra.mxu0 %v1728
  %1730 = vmatprep.subr.mxu0 0.0
  %v1731 = vand.u32 %v1137, 4294901760
  %1732 = vmatpush1.msra.mxu0 %v1731
  %1733 = vmatprep.subr.mxu0 0.0
  %v1734 = vand.u32 %v1138, 4294901760
  %1735 = vmatpush1.msra.mxu0 %v1734
  %1736 = vmatprep.subr.mxu0 0.0
  %v1737 = vand.u32 %v1139, 4294901760
  %1738 = vmatpush1.msra.mxu0 %v1737
  %1739 = vmatprep.subr.mxu0 0.0
  %v1740 = vand.u32 %v1140, 4294901760
  %1741 = vmatpush1.msra.mxu0 %v1740
  %1742 = vmatprep.subr.mxu0 0.0
  %v1743 = vand.u32 %v1141, 4294901760
  %1744 = vmatpush1.msra.mxu0 %v1743
  %1745 = vmatprep.subr.mxu0 0.0
  %v1746 = vand.u32 %v1142, 4294901760
  %1747 = vmatpush1.msra.mxu0 %v1746
  %1748 = vmatprep.subr.mxu0 0.0
  %v1749 = vand.u32 %v1143, 4294901760
  %1750 = vmatpush1.msra.mxu0 %v1749
  %1751 = vmatprep.subr.mxu0 0.0
  %v1752 = vand.u32 %v1144, 4294901760
  %1753 = vmatpush1.msra.mxu0 %v1752
  %1754 = vmatprep.subr.mxu0 0.0
  %1755 = vmatpush1.msra.mxu0 0.0
  %1756 = vmatprep.subr.mxu0 0.0
  %1757 = vmatpush1.msra.mxu0 0.0
  %1758 = vmatprep.subr.mxu0 0.0
  %1759 = vmatpush1.msra.mxu0 0.0
  %1760 = vmatprep.subr.mxu0 0.0
  %1761 = vmatpush1.msra.mxu0 0.0
  %1762 = vmatprep.subr.mxu0 0.0
  %1763 = vmatpush1.msra.mxu0 0.0
  %1764 = vmatprep.subr.mxu0 0.0
  %1765 = vmatpush1.msra.mxu0 0.0
  %1766 = vmatprep.subr.mxu0 0.0
  %1767 = vmatpush1.msra.mxu0 0.0
  %1768 = vmatprep.subr.mxu0 0.0
  %1769 = vmatpush1.msra.mxu0 0.0
  %1770 = vmatprep.subr.mxu0 0.0
  %1771 = vmatpush1.msra.mxu0 0.0
  %1772 = vmatprep.subr.mxu0 0.0
  %1773 = vmatpush1.msra.mxu0 0.0
  %1774 = vmatprep.subr.mxu0 0.0
  %1775 = vmatpush1.msra.mxu0 0.0
  %1776 = vmatprep.subr.mxu0 0.0
  %1777 = vmatpush1.msra.mxu0 0.0
  %1778 = vmatprep.subr.mxu0 0.0
  %1779 = vmatpush1.msra.mxu0 0.0
  %1780 = vmatprep.subr.mxu0 0.0
  %1781 = vmatpush1.msra.mxu0 0.0
  %1782 = vmatprep.subr.mxu0 0.0
  %1783 = vmatpush1.msra.mxu0 0.0
  %1784 = vmatprep.subr.mxu0 0.0
  %1785 = vmatpush1.msra.mxu0 0.0
  %1786 = vmatprep.mubr.f32.mxu0 0.0
  %v1787 = vand.u32 %v1128, 4294901760
  %1788 = vmatmul.mubr.f32.gmra.mrb[0].mxu0 %v1787
  %v1789 = vpop.f32.mrb[0].mxu0
  %v1790 = vadd.f32 %v1703, %v1789
  %v1791 = vpop.f32.mrb[0].mxu0
  %1792 = vdwg.mxu0
  %v1793 = vmax.f32 %v1790, 0.0
  %v1794 = vld [vmem:[%s6] sm:$0xff]
  %v1795 = vld [vmem:[%s6 + $0x8] sm:$0xff]
  %v1796 = vld [vmem:[%s6 + $0x10] sm:$0xff]
  %v1797 = vld [vmem:[%s6 + $0x18] sm:$0xff]
  %v1798 = vld [vmem:[%s6 + $0x20] sm:$0xff]
  %v1799 = vld [vmem:[%s6 + $0x28] sm:$0xff]
  %v1800 = vld [vmem:[%s6 + $0x30] sm:$0xff]
  %v1801 = vld [vmem:[%s6 + $0x38] sm:$0xff]
  %v1802 = vld [vmem:[%s6 + $0x40] sm:$0xff]
  %v1803 = vld [vmem:[%s6 + $0x48] sm:$0xff]
  %v1804 = vld [vmem:[%s6 + $0x50] sm:$0xff]
  %v1805 = vld [vmem:[%s6 + $0x58] sm:$0xff]
  %v1806 = vld [vmem:[%s6 + $0x60] sm:$0xff]
  %v1807 = vld [vmem:[%s6 + $0x68] sm:$0xff]
  %v1808 = vld [vmem:[%s6 + $0x70] sm:$0xff]
  %v1809 = vld [vmem:[%s6 + $0x78] sm:$0xff]
  %v1810 = vld [vmem:[%s7] sm:$0x1]
  %v1812 = vlaneseq
  %v1813 = vshrl.u32 %v1812, 7
  %v1814 = vsub.s32 0, %v1813
  %v1815 = vrot.slane %v1810, %v1814
  %1817 = vmatprep.subr.mxu0 0.0
  %v1818 = vand.u32 %v1794, 4294901760
  %1819 = vmatpush1.msra.mxu0 %v1818
  %1820 = vmatprep.subr.mxu0 0.0
  %v1821 = vand.u32 %v1795, 4294901760
  %1822 = vmatpush1.msra.mxu0 %v1821
  %1823 = vmatprep.subr.mxu0 0.0
  %v1824 = vand.u32 %v1796, 4294901760
  %1825 = vmatpush1.msra.mxu0 %v1824
  %1826 = vmatprep.subr.mxu0 0.0
  %v1827 = vand.u32 %v1797, 4294901760
  %1828 = vmatpush1.msra.mxu0 %v1827
  %1829 = vmatprep.subr.mxu0 0.0
  %v1830 = vand.u32 %v1798, 4294901760
  %1831 = vmatpush1.msra.mxu0 %v1830
  %1832 = vmatprep.subr.mxu0 0.0
  %v1833 = vand.u32 %v1799, 4294901760
  %1834 = vmatpush1.msra.mxu0 %v1833
  %1835 = vmatprep.subr.mxu0 0.0
  %v1836 = vand.u32 %v1800, 4294901760
  %1837 = vmatpush1.msra.mxu0 %v1836
  %1838 = vmatprep.subr.mxu0 0.0
  %v1839 = vand.u32 %v1801, 4294901760
  %1840 = vmatpush1.msra.mxu0 %v1839
  %1841 = vmatprep.subr.mxu0 0.0
  %v1842 = vand.u32 %v1802, 4294901760
  %1843 = vmatpush1.msra.mxu0 %v1842
  %1844 = vmatprep.subr.mxu0 0.0
  %v1845 = vand.u32 %v1803, 4294901760
  %1846 = vmatpush1.msra.mxu0 %v1845
  %1847 = vmatprep.subr.mxu0 0.0
  %v1848 = vand.u32 %v1804, 4294901760
  %1849 = vmatpush1.msra.mxu0 %v1848
  %1850 = vmatprep.subr.mxu0 0.0
  %v1851 = vand.u32 %v1805, 4294901760
  %1852 = vmatpush1.msra.mxu0 %v1851
  %1853 = vmatprep.subr.mxu0 0.0
  %v1854 = vand.u32 %v1806, 4294901760
  %1855 = vmatpush1.msra.mxu0 %v1854
  %1856 = vmatprep.subr.mxu0 0.0
  %v1857 = vand.u32 %v1807, 4294901760
  %1858 = vmatpush1.msra.mxu0 %v1857
  %1859 = vmatprep.subr.mxu0 0.0
  %v1860 = vand.u32 %v1808, 4294901760
  %1861 = vmatpush1.msra.mxu0 %v1860
  %1862 = vmatprep.subr.mxu0 0.0
  %v1863 = vand.u32 %v1809, 4294901760
  %1864 = vmatpush1.msra.mxu0 %v1863
  %1865 = vmatprep.subr.mxu0 0.0
  %1866 = vmatpush1.msra.mxu0 0.0
  %1867 = vmatprep.subr.mxu0 0.0
  %1868 = vmatpush1.msra.mxu0 0.0
  %1869 = vmatprep.subr.mxu0 0.0
  %1870 = vmatpush1.msra.mxu0 0.0
  %1871 = vmatprep.subr.mxu0 0.0
  %1872 = vmatpush1.msra.mxu0 0.0
  %1873 = vmatprep.subr.mxu0 0.0
  %1874 = vmatpush1.msra.mxu0 0.0
  %1875 = vmatprep.subr.mxu0 0.0
  %1876 = vmatpush1.msra.mxu0 0.0
  %1877 = vmatprep.subr.mxu0 0.0
  %1878 = vmatpush1.msra.mxu0 0.0
  %1879 = vmatprep.subr.mxu0 0.0
  %1880 = vmatpush1.msra.mxu0 0.0
  %1881 = vmatprep.subr.mxu0 0.0
  %1882 = vmatpush1.msra.mxu0 0.0
  %1883 = vmatprep.subr.mxu0 0.0
  %1884 = vmatpush1.msra.mxu0 0.0
  %1885 = vmatprep.subr.mxu0 0.0
  %1886 = vmatpush1.msra.mxu0 0.0
  %1887 = vmatprep.subr.mxu0 0.0
  %1888 = vmatpush1.msra.mxu0 0.0
  %1889 = vmatprep.subr.mxu0 0.0
  %1890 = vmatpush1.msra.mxu0 0.0
  %1891 = vmatprep.subr.mxu0 0.0
  %1892 = vmatpush1.msra.mxu0 0.0
  %1893 = vmatprep.subr.mxu0 0.0
  %1894 = vmatpush1.msra.mxu0 0.0
  %1895 = vmatprep.subr.mxu0 0.0
  %1896 = vmatpush1.msra.mxu0 0.0
  %1897 = vmatprep.mubr.f32.mxu0 0.0
  %v1898 = vand.u32 %v1793, 4294901760
  %v1899 = vsub.f32 %v1793, %v1898
  %v1900 = vand.u32 %v1899, 4294901760
  %v1901 = vsub.f32 %v1899, %v1900
  %v1902 = vand.u32 %v1901, 4294901760
  %1903 = vmatmul.mubr.f32.gmra.mrb[0].mxu0 %v1902
  %v1904 = vpop.f32.mrb[0].mxu0
  %v1905 = vadd.f32 %v1815, %v1904
  %v1906 = vpop.f32.mrb[0].mxu0
  %1907 = vdwg.mxu0
  %1908 = vmatprep.subr.mxu0 0.0
  %v1909 = vand.u32 %v1794, 4294901760
  %v1910 = vsub.f32 %v1794, %v1909
  %v1911 = vand.u32 %v1910, 4294901760
  %v1912 = vsub.f32 %v1910, %v1911
  %v1913 = vand.u32 %v1912, 4294901760
  %1914 = vmatpush1.msra.mxu0 %v1913
  %1915 = vmatprep.subr.mxu0 0.0
  %v1916 = vand.u32 %v1795, 4294901760
  %v1917 = vsub.f32 %v1795, %v1916
  %v1918 = vand.u32 %v1917, 4294901760
  %v1919 = vsub.f32 %v1917, %v1918
  %v1920 = vand.u32 %v1919, 4294901760
  %1921 = vmatpush1.msra.mxu0 %v1920
  %1922 = vmatprep.subr.mxu0 0.0
  %v1923 = vand.u32 %v1796, 4294901760
  %v1924 = vsub.f32 %v1796, %v1923
  %v1925 = vand.u32 %v1924, 4294901760
  %v1926 = vsub.f32 %v1924, %v1925
  %v1927 = vand.u32 %v1926, 4294901760
  %1928 = vmatpush1.msra.mxu0 %v1927
  %1929 = vmatprep.subr.mxu0 0.0
  %v1930 = vand.u32 %v1797, 4294901760
  %v1931 = vsub.f32 %v1797, %v1930
  %v1932 = vand.u32 %v1931, 4294901760
  %v1933 = vsub.f32 %v1931, %v1932
  %v1934 = vand.u32 %v1933, 4294901760
  %1935 = vmatpush1.msra.mxu0 %v1934
  %1936 = vmatprep.subr.mxu0 0.0
  %v1937 = vand.u32 %v1798, 4294901760
  %v1938 = vsub.f32 %v1798, %v1937
  %v1939 = vand.u32 %v1938, 4294901760
  %v1940 = vsub.f32 %v1938, %v1939
  %v1941 = vand.u32 %v1940, 4294901760
  %1942 = vmatpush1.msra.mxu0 %v1941
  %1943 = vmatprep.subr.mxu0 0.0
  %v1944 = vand.u32 %v1799, 4294901760
  %v1945 = vsub.f32 %v1799, %v1944
  %v1946 = vand.u32 %v1945, 4294901760
  %v1947 = vsub.f32 %v1945, %v1946
  %v1948 = vand.u32 %v1947, 4294901760
  %1949 = vmatpush1.msra.mxu0 %v1948
  %1950 = vmatprep.subr.mxu0 0.0
  %v1951 = vand.u32 %v1800, 4294901760
  %v1952 = vsub.f32 %v1800, %v1951
  %v1953 = vand.u32 %v1952, 4294901760
  %v1954 = vsub.f32 %v1952, %v1953
  %v1955 = vand.u32 %v1954, 4294901760
  %1956 = vmatpush1.msra.mxu0 %v1955
  %1957 = vmatprep.subr.mxu0 0.0
  %v1958 = vand.u32 %v1801, 4294901760
  %v1959 = vsub.f32 %v1801, %v1958
  %v1960 = vand.u32 %v1959, 4294901760
  %v1961 = vsub.f32 %v1959, %v1960
  %v1962 = vand.u32 %v1961, 4294901760
  %1963 = vmatpush1.msra.mxu0 %v1962
  %1964 = vmatprep.subr.mxu0 0.0
  %v1965 = vand.u32 %v1802, 4294901760
  %v1966 = vsub.f32 %v1802, %v1965
  %v1967 = vand.u32 %v1966, 4294901760
  %v1968 = vsub.f32 %v1966, %v1967
  %v1969 = vand.u32 %v1968, 4294901760
  %1970 = vmatpush1.msra.mxu0 %v1969
  %1971 = vmatprep.subr.mxu0 0.0
  %v1972 = vand.u32 %v1803, 4294901760
  %v1973 = vsub.f32 %v1803, %v1972
  %v1974 = vand.u32 %v1973, 4294901760
  %v1975 = vsub.f32 %v1973, %v1974
  %v1976 = vand.u32 %v1975, 4294901760
  %1977 = vmatpush1.msra.mxu0 %v1976
  %1978 = vmatprep.subr.mxu0 0.0
  %v1979 = vand.u32 %v1804, 4294901760
  %v1980 = vsub.f32 %v1804, %v1979
  %v1981 = vand.u32 %v1980, 4294901760
  %v1982 = vsub.f32 %v1980, %v1981
  %v1983 = vand.u32 %v1982, 4294901760
  %1984 = vmatpush1.msra.mxu0 %v1983
  %1985 = vmatprep.subr.mxu0 0.0
  %v1986 = vand.u32 %v1805, 4294901760
  %v1987 = vsub.f32 %v1805, %v1986
  %v1988 = vand.u32 %v1987, 4294901760
  %v1989 = vsub.f32 %v1987, %v1988
  %v1990 = vand.u32 %v1989, 4294901760
  %1991 = vmatpush1.msra.mxu0 %v1990
  %1992 = vmatprep.subr.mxu0 0.0
  %v1993 = vand.u32 %v1806, 4294901760
  %v1994 = vsub.f32 %v1806, %v1993
  %v1995 = vand.u32 %v1994, 4294901760
  %v1996 = vsub.f32 %v1994, %v1995
  %v1997 = vand.u32 %v1996, 4294901760
  %1998 = vmatpush1.msra.mxu0 %v1997
  %1999 = vmatprep.subr.mxu0 0.0
  %v2000 = vand.u32 %v1807, 4294901760
  %v2001 = vsub.f32 %v1807, %v2000
  %v2002 = vand.u32 %v2001, 4294901760
  %v2003 = vsub.f32 %v2001, %v2002
  %v2004 = vand.u32 %v2003, 4294901760
  %2005 = vmatpush1.msra.mxu0 %v2004
  %2006 = vmatprep.subr.mxu0 0.0
  %v2007 = vand.u32 %v1808, 4294901760
  %v2008 = vsub.f32 %v1808, %v2007
  %v2009 = vand.u32 %v2008, 4294901760
  %v2010 = vsub.f32 %v2008, %v2009
  %v2011 = vand.u32 %v2010, 4294901760
  %2012 = vmatpush1.msra.mxu0 %v2011
  %2013 = vmatprep.subr.mxu0 0.0
  %v2014 = vand.u32 %v1809, 4294901760
  %v2015 = vsub.f32 %v1809, %v2014
  %v2016 = vand.u32 %v2015, 4294901760
  %v2017 = vsub.f32 %v2015, %v2016
  %v2018 = vand.u32 %v2017, 4294901760
  %2019 = vmatpush1.msra.mxu0 %v2018
  %2020 = vmatprep.subr.mxu0 0.0
  %2021 = vmatpush1.msra.mxu0 0.0
  %2022 = vmatprep.subr.mxu0 0.0
  %2023 = vmatpush1.msra.mxu0 0.0
  %2024 = vmatprep.subr.mxu0 0.0
  %2025 = vmatpush1.msra.mxu0 0.0
  %2026 = vmatprep.subr.mxu0 0.0
  %2027 = vmatpush1.msra.mxu0 0.0
  %2028 = vmatprep.subr.mxu0 0.0
  %2029 = vmatpush1.msra.mxu0 0.0
  %2030 = vmatprep.subr.mxu0 0.0
  %2031 = vmatpush1.msra.mxu0 0.0
  %2032 = vmatprep.subr.mxu0 0.0
  %2033 = vmatpush1.msra.mxu0 0.0
  %2034 = vmatprep.subr.mxu0 0.0
  %2035 = vmatpush1.msra.mxu0 0.0
  %2036 = vmatprep.subr.mxu0 0.0
  %2037 = vmatpush1.msra.mxu0 0.0
  %2038 = vmatprep.subr.mxu0 0.0
  %2039 = vmatpush1.msra.mxu0 0.0
  %2040 = vmatprep.subr.mxu0 0.0
  %2041 = vmatpush1.msra.mxu0 0.0
  %2042 = vmatprep.subr.mxu0 0.0
  %2043 = vmatpush1.msra.mxu0 0.0
  %2044 = vmatprep.subr.mxu0 0.0
  %2045 = vmatpush1.msra.mxu0 0.0
  %2046 = vmatprep.subr.mxu0 0.0
  %2047 = vmatpush1.msra.mxu0 0.0
  %2048 = vmatprep.subr.mxu0 0.0
  %2049 = vmatpush1.msra.mxu0 0.0
  %2050 = vmatprep.subr.mxu0 0.0
  %2051 = vmatpush1.msra.mxu0 0.0
  %2052 = vmatprep.mubr.f32.mxu0 0.0
  %v2053 = vand.u32 %v1793, 4294901760
  %2054 = vmatmul.mubr.f32.gmra.mrb[0].mxu0 %v2053
  %v2055 = vpop.f32.mrb[0].mxu0
  %v2056 = vadd.f32 %v1905, %v2055
  %v2057 = vpop.f32.mrb[0].mxu0
  %2058 = vdwg.mxu0
  %2059 = vmatprep.subr.mxu0 0.0
  %v2060 = vand.u32 %v1794, 4294901760
  %v2061 = vsub.f32 %v1794, %v2060
  %2062 = vmatpush1.msra.mxu0 %v2061
  %2063 = vmatprep.subr.mxu0 0.0
  %v2064 = vand.u32 %v1795, 4294901760
  %v2065 = vsub.f32 %v1795, %v2064
  %2066 = vmatpush1.msra.mxu0 %v2065
  %2067 = vmatprep.subr.mxu0 0.0
  %v2068 = vand.u32 %v1796, 4294901760
  %v2069 = vsub.f32 %v1796, %v2068
  %2070 = vmatpush1.msra.mxu0 %v2069
  %2071 = vmatprep.subr.mxu0 0.0
  %v2072 = vand.u32 %v1797, 4294901760
  %v2073 = vsub.f32 %v1797, %v2072
  %2074 = vmatpush1.msra.mxu0 %v2073
  %2075 = vmatprep.subr.mxu0 0.0
  %v2076 = vand.u32 %v1798, 4294901760
  %v2077 = vsub.f32 %v1798, %v2076
  %2078 = vmatpush1.msra.mxu0 %v2077
  %2079 = vmatprep.subr.mxu0 0.0
  %v2080 = vand.u32 %v1799, 4294901760
  %v2081 = vsub.f32 %v1799, %v2080
  %2082 = vmatpush1.msra.mxu0 %v2081
  %2083 = vmatprep.subr.mxu0 0.0
  %v2084 = vand.u32 %v1800, 4294901760
  %v2085 = vsub.f32 %v1800, %v2084
  %2086 = vmatpush1.msra.mxu0 %v2085
  %2087 = vmatprep.subr.mxu0 0.0
  %v2088 = vand.u32 %v1801, 4294901760
  %v2089 = vsub.f32 %v1801, %v2088
  %2090 = vmatpush1.msra.mxu0 %v2089
  %2091 = vmatprep.subr.mxu0 0.0
  %v2092 = vand.u32 %v1802, 4294901760
  %v2093 = vsub.f32 %v1802, %v2092
  %2094 = vmatpush1.msra.mxu0 %v2093
  %2095 = vmatprep.subr.mxu0 0.0
  %v2096 = vand.u32 %v1803, 4294901760
  %v2097 = vsub.f32 %v1803, %v2096
  %2098 = vmatpush1.msra.mxu0 %v2097
  %2099 = vmatprep.subr.mxu0 0.0
  %v2100 = vand.u32 %v1804, 4294901760
  %v2101 = vsub.f32 %v1804, %v2100
  %2102 = vmatpush1.msra.mxu0 %v2101
  %2103 = vmatprep.subr.mxu0 0.0
  %v2104 = vand.u32 %v1805, 4294901760
  %v2105 = vsub.f32 %v1805, %v2104
  %2106 = vmatpush1.msra.mxu0 %v2105
  %2107 = vmatprep.subr.mxu0 0.0
  %v2108 = vand.u32 %v1806, 4294901760
  %v2109 = vsub.f32 %v1806, %v2108
  %2110 = vmatpush1.msra.mxu0 %v2109
  %2111 = vmatprep.subr.mxu0 0.0
  %v2112 = vand.u32 %v1807, 4294901760
  %v2113 = vsub.f32 %v1807, %v2112
  %2114 = vmatpush1.msra.mxu0 %v2113
  %2115 = vmatprep.subr.mxu0 0.0
  %v2116 = vand.u32 %v1808, 4294901760
  %v2117 = vsub.f32 %v1808, %v2116
  %2118 = vmatpush1.msra.mxu0 %v2117
  %2119 = vmatprep.subr.mxu0 0.0
  %v2120 = vand.u32 %v1809, 4294901760
  %v2121 = vsub.f32 %v1809, %v2120
  %2122 = vmatpush1.msra.mxu0 %v2121
  %2123 = vmatprep.subr.mxu0 0.0
  %2124 = vmatpush1.msra.mxu0 0.0
  %2125 = vmatprep.subr.mxu0 0.0
  %2126 = vmatpush1.msra.mxu0 0.0
  %2127 = vmatprep.subr.mxu0 0.0
  %2128 = vmatpush1.msra.mxu0 0.0
  %2129 = vmatprep.subr.mxu0 0.0
  %2130 = vmatpush1.msra.mxu0 0.0
  %2131 = vmatprep.subr.mxu0 0.0
  %2132 = vmatpush1.msra.mxu0 0.0
  %2133 = vmatprep.subr.mxu0 0.0
  %2134 = vmatpush1.msra.mxu0 0.0
  %2135 = vmatprep.subr.mxu0 0.0
  %2136 = vmatpush1.msra.mxu0 0.0
  %2137 = vmatprep.subr.mxu0 0.0
  %2138 = vmatpush1.msra.mxu0 0.0
  %2139 = vmatprep.subr.mxu0 0.0
  %2140 = vmatpush1.msra.mxu0 0.0
  %2141 = vmatprep.subr.mxu0 0.0
  %2142 = vmatpush1.msra.mxu0 0.0
  %2143 = vmatprep.subr.mxu0 0.0
  %2144 = vmatpush1.msra.mxu0 0.0
  %2145 = vmatprep.subr.mxu0 0.0
  %2146 = vmatpush1.msra.mxu0 0.0
  %2147 = vmatprep.subr.mxu0 0.0
  %2148 = vmatpush1.msra.mxu0 0.0
  %2149 = vmatprep.subr.mxu0 0.0
  %2150 = vmatpush1.msra.mxu0 0.0
  %2151 = vmatprep.subr.mxu0 0.0
  %2152 = vmatpush1.msra.mxu0 0.0
  %2153 = vmatprep.subr.mxu0 0.0
  %2154 = vmatpush1.msra.mxu0 0.0
  %2155 = vmatprep.mubr.f32.mxu0 0.0
  %v2156 = vand.u32 %v1793, 4294901760
  %v2157 = vsub.f32 %v1793, %v2156
  %2158 = vmatmul.mubr.f32.gmra.mrb[0].mxu0 %v2157
  %v2159 = vpop.f32.mrb[0].mxu0
  %v2160 = vadd.f32 %v2056, %v2159
  %v2161 = vpop.f32.mrb[0].mxu0
  %2162 = vdwg.mxu0
  %2163 = vmatprep.subr.mxu0 0.0
  %v2164 = vand.u32 %v1794, 4294901760
  %2165 = vmatpush1.msra.mxu0 %v2164
  %2166 = vmatprep.subr.mxu0 0.0
  %v2167 = vand.u32 %v1795, 4294901760
  %2168 = vmatpush1.msra.mxu0 %v2167
  %2169 = vmatprep.subr.mxu0 0.0
  %v2170 = vand.u32 %v1796, 4294901760
  %2171 = vmatpush1.msra.mxu0 %v2170
  %2172 = vmatprep.subr.mxu0 0.0
  %v2173 = vand.u32 %v1797, 4294901760
  %2174 = vmatpush1.msra.mxu0 %v2173
  %2175 = vmatprep.subr.mxu0 0.0
  %v2176 = vand.u32 %v1798, 4294901760
  %2177 = vmatpush1.msra.mxu0 %v2176
  %2178 = vmatprep.subr.mxu0 0.0
  %v2179 = vand.u32 %v1799, 4294901760
  %2180 = vmatpush1.msra.mxu0 %v2179
  %2181 = vmatprep.subr.mxu0 0.0
  %v2182 = vand.u32 %v1800, 4294901760
  %2183 = vmatpush1.msra.mxu0 %v2182
  %2184 = vmatprep.subr.mxu0 0.0
  %v2185 = vand.u32 %v1801, 4294901760
  %2186 = vmatpush1.msra.mxu0 %v2185
  %2187 = vmatprep.subr.mxu0 0.0
  %v2188 = vand.u32 %v1802, 4294901760
  %2189 = vmatpush1.msra.mxu0 %v2188
  %2190 = vmatprep.subr.mxu0 0.0
  %v2191 = vand.u32 %v1803, 4294901760
  %2192 = vmatpush1.msra.mxu0 %v2191
  %2193 = vmatprep.subr.mxu0 0.0
  %v2194 = vand.u32 %v1804, 4294901760
  %2195 = vmatpush1.msra.mxu0 %v2194
  %2196 = vmatprep.subr.mxu0 0.0
  %v2197 = vand.u32 %v1805, 4294901760
  %2198 = vmatpush1.msra.mxu0 %v2197
  %2199 = vmatprep.subr.mxu0 0.0
  %v2200 = vand.u32 %v1806, 4294901760
  %2201 = vmatpush1.msra.mxu0 %v2200
  %2202 = vmatprep.subr.mxu0 0.0
  %v2203 = vand.u32 %v1807, 4294901760
  %2204 = vmatpush1.msra.mxu0 %v2203
  %2205 = vmatprep.subr.mxu0 0.0
  %v2206 = vand.u32 %v1808, 4294901760
  %2207 = vmatpush1.msra.mxu0 %v2206
  %2208 = vmatprep.subr.mxu0 0.0
  %v2209 = vand.u32 %v1809, 4294901760
  %2210 = vmatpush1.msra.mxu0 %v2209
  %2211 = vmatprep.subr.mxu0 0.0
  %2212 = vmatpush1.msra.mxu0 0.0
  %2213 = vmatprep.subr.mxu0 0.0
  %2214 = vmatpush1.msra.mxu0 0.0
  %2215 = vmatprep.subr.mxu0 0.0
  %2216 = vmatpush1.msra.mxu0 0.0
  %2217 = vmatprep.subr.mxu0 0.0
  %2218 = vmatpush1.msra.mxu0 0.0
  %2219 = vmatprep.subr.mxu0 0.0
  %2220 = vmatpush1.msra.mxu0 0.0
  %2221 = vmatprep.subr.mxu0 0.0
  %2222 = vmatpush1.msra.mxu0 0.0
  %2223 = vmatprep.subr.mxu0 0.0
  %2224 = vmatpush1.msra.mxu0 0.0
  %2225 = vmatprep.subr.mxu0 0.0
  %2226 = vmatpush1.msra.mxu0 0.0
  %2227 = vmatprep.subr.mxu0 0.0
  %2228 = vmatpush1.msra.mxu0 0.0
  %2229 = vmatprep.subr.mxu0 0.0
  %2230 = vmatpush1.msra.mxu0 0.0
  %2231 = vmatprep.subr.mxu0 0.0
  %2232 = vmatpush1.msra.mxu0 0.0
  %2233 = vmatprep.subr.mxu0 0.0
  %2234 = vmatpush1.msra.mxu0 0.0
  %2235 = vmatprep.subr.mxu0 0.0
  %2236 = vmatpush1.msra.mxu0 0.0
  %2237 = vmatprep.subr.mxu0 0.0
  %2238 = vmatpush1.msra.mxu0 0.0
  %2239 = vmatprep.subr.mxu0 0.0
  %2240 = vmatpush1.msra.mxu0 0.0
  %2241 = vmatprep.subr.mxu0 0.0
  %2242 = vmatpush1.msra.mxu0 0.0
  %2243 = vmatprep.mubr.f32.mxu0 0.0
  %v2244 = vand.u32 %v1793, 4294901760
  %v2245 = vsub.f32 %v1793, %v2244
  %v2246 = vand.u32 %v2245, 4294901760
  %2247 = vmatmul.mubr.f32.gmra.mrb[0].mxu0 %v2246
  %v2248 = vpop.f32.mrb[0].mxu0
  %v2249 = vadd.f32 %v2160, %v2248
  %v2250 = vpop.f32.mrb[0].mxu0
  %2251 = vdwg.mxu0
  %2252 = vmatprep.subr.mxu0 0.0
  %v2253 = vand.u32 %v1794, 4294901760
  %v2254 = vsub.f32 %v1794, %v2253
  %v2255 = vand.u32 %v2254, 4294901760
  %2256 = vmatpush1.msra.mxu0 %v2255
  %2257 = vmatprep.subr.mxu0 0.0
  %v2258 = vand.u32 %v1795, 4294901760
  %v2259 = vsub.f32 %v1795, %v2258
  %v2260 = vand.u32 %v2259, 4294901760
  %2261 = vmatpush1.msra.mxu0 %v2260
  %2262 = vmatprep.subr.mxu0 0.0
  %v2263 = vand.u32 %v1796, 4294901760
  %v2264 = vsub.f32 %v1796, %v2263
  %v2265 = vand.u32 %v2264, 4294901760
  %2266 = vmatpush1.msra.mxu0 %v2265
  %2267 = vmatprep.subr.mxu0 0.0
  %v2268 = vand.u32 %v1797, 4294901760
  %v2269 = vsub.f32 %v1797, %v2268
  %v2270 = vand.u32 %v2269, 4294901760
  %2271 = vmatpush1.msra.mxu0 %v2270
  %2272 = vmatprep.subr.mxu0 0.0
  %v2273 = vand.u32 %v1798, 4294901760
  %v2274 = vsub.f32 %v1798, %v2273
  %v2275 = vand.u32 %v2274, 4294901760
  %2276 = vmatpush1.msra.mxu0 %v2275
  %2277 = vmatprep.subr.mxu0 0.0
  %v2278 = vand.u32 %v1799, 4294901760
  %v2279 = vsub.f32 %v1799, %v2278
  %v2280 = vand.u32 %v2279, 4294901760
  %2281 = vmatpush1.msra.mxu0 %v2280
  %2282 = vmatprep.subr.mxu0 0.0
  %v2283 = vand.u32 %v1800, 4294901760
  %v2284 = vsub.f32 %v1800, %v2283
  %v2285 = vand.u32 %v2284, 4294901760
  %2286 = vmatpush1.msra.mxu0 %v2285
  %2287 = vmatprep.subr.mxu0 0.0
  %v2288 = vand.u32 %v1801, 4294901760
  %v2289 = vsub.f32 %v1801, %v2288
  %v2290 = vand.u32 %v2289, 4294901760
  %2291 = vmatpush1.msra.mxu0 %v2290
  %2292 = vmatprep.subr.mxu0 0.0
  %v2293 = vand.u32 %v1802, 4294901760
  %v2294 = vsub.f32 %v1802, %v2293
  %v2295 = vand.u32 %v2294, 4294901760
  %2296 = vmatpush1.msra.mxu0 %v2295
  %2297 = vmatprep.subr.mxu0 0.0
  %v2298 = vand.u32 %v1803, 4294901760
  %v2299 = vsub.f32 %v1803, %v2298
  %v2300 = vand.u32 %v2299, 4294901760
  %2301 = vmatpush1.msra.mxu0 %v2300
  %2302 = vmatprep.subr.mxu0 0.0
  %v2303 = vand.u32 %v1804, 4294901760
  %v2304 = vsub.f32 %v1804, %v2303
  %v2305 = vand.u32 %v2304, 4294901760
  %2306 = vmatpush1.msra.mxu0 %v2305
  %2307 = vmatprep.subr.mxu0 0.0
  %v2308 = vand.u32 %v1805, 4294901760
  %v2309 = vsub.f32 %v1805, %v2308
  %v2310 = vand.u32 %v2309, 4294901760
  %2311 = vmatpush1.msra.mxu0 %v2310
  %2312 = vmatprep.subr.mxu0 0.0
  %v2313 = vand.u32 %v1806, 4294901760
  %v2314 = vsub.f32 %v1806, %v2313
  %v2315 = vand.u32 %v2314, 4294901760
  %2316 = vmatpush1.msra.mxu0 %v2315
  %2317 = vmatprep.subr.mxu0 0.0
  %v2318 = vand.u32 %v1807, 4294901760
  %v2319 = vsub.f32 %v1807, %v2318
  %v2320 = vand.u32 %v2319, 4294901760
  %2321 = vmatpush1.msra.mxu0 %v2320
  %2322 = vmatprep.subr.mxu0 0.0
  %v2323 = vand.u32 %v1808, 4294901760
  %v2324 = vsub.f32 %v1808, %v2323
  %v2325 = vand.u32 %v2324, 4294901760
  %2326 = vmatpush1.msra.mxu0 %v2325
  %2327 = vmatprep.subr.mxu0 0.0
  %v2328 = vand.u32 %v1809, 4294901760
  %v2329 = vsub.f32 %v1809, %v2328
  %v2330 = vand.u32 %v2329, 4294901760
  %2331 = vmatpush1.msra.mxu0 %v2330
  %2332 = vmatprep.subr.mxu0 0.0
  %2333 = vmatpush1.msra.mxu0 0.0
  %2334 = vmatprep.subr.mxu0 0.0
  %2335 = vmatpush1.msra.mxu0 0.0
  %2336 = vmatprep.subr.mxu0 0.0
  %2337 = vmatpush1.msra.mxu0 0.0
  %2338 = vmatprep.subr.mxu0 0.0
  %2339 = vmatpush1.msra.mxu0 0.0
  %2340 = vmatprep.subr.mxu0 0.0
  %2341 = vmatpush1.msra.mxu0 0.0
  %2342 = vmatprep.subr.mxu0 0.0
  %2343 = vmatpush1.msra.mxu0 0.0
  %2344 = vmatprep.subr.mxu0 0.0
  %2345 = vmatpush1.msra.mxu0 0.0
  %2346 = vmatprep.subr.mxu0 0.0
  %2347 = vmatpush1.msra.mxu0 0.0
  %2348 = vmatprep.subr.mxu0 0.0
  %2349 = vmatpush1.msra.mxu0 0.0
  %2350 = vmatprep.subr.mxu0 0.0
  %2351 = vmatpush1.msra.mxu0 0.0
  %2352 = vmatprep.subr.mxu0 0.0
  %2353 = vmatpush1.msra.mxu0 0.0
  %2354 = vmatprep.subr.mxu0 0.0
  %2355 = vmatpush1.msra.mxu0 0.0
  %2356 = vmatprep.subr.mxu0 0.0
  %2357 = vmatpush1.msra.mxu0 0.0
  %2358 = vmatprep.subr.mxu0 0.0
  %2359 = vmatpush1.msra.mxu0 0.0
  %2360 = vmatprep.subr.mxu0 0.0
  %2361 = vmatpush1.msra.mxu0 0.0
  %2362 = vmatprep.subr.mxu0 0.0
  %2363 = vmatpush1.msra.mxu0 0.0
  %2364 = vmatprep.mubr.f32.mxu0 0.0
  %v2365 = vand.u32 %v1793, 4294901760
  %2366 = vmatmul.mubr.f32.gmra.mrb[0].mxu0 %v2365
  %v2367 = vpop.f32.mrb[0].mxu0
  %v2368 = vadd.f32 %v2249, %v2367
  %v2369 = vpop.f32.mrb[0].mxu0
  %2370 = vdwg.mxu0
  %2371 = vmatprep.subr.mxu0 0.0
  %v2372 = vand.u32 %v1794, 4294901760
  %2373 = vmatpush1.msra.mxu0 %v2372
  %2374 = vmatprep.subr.mxu0 0.0
  %v2375 = vand.u32 %v1795, 4294901760
  %2376 = vmatpush1.msra.mxu0 %v2375
  %2377 = vmatprep.subr.mxu0 0.0
  %v2378 = vand.u32 %v1796, 4294901760
  %2379 = vmatpush1.msra.mxu0 %v2378
  %2380 = vmatprep.subr.mxu0 0.0
  %v2381 = vand.u32 %v1797, 4294901760
  %2382 = vmatpush1.msra.mxu0 %v2381
  %2383 = vmatprep.subr.mxu0 0.0
  %v2384 = vand.u32 %v1798, 4294901760
  %2385 = vmatpush1.msra.mxu0 %v2384
  %2386 = vmatprep.subr.mxu0 0.0
  %v2387 = vand.u32 %v1799, 4294901760
  %2388 = vmatpush1.msra.mxu0 %v2387
  %2389 = vmatprep.subr.mxu0 0.0
  %v2390 = vand.u32 %v1800, 4294901760
  %2391 = vmatpush1.msra.mxu0 %v2390
  %2392 = vmatprep.subr.mxu0 0.0
  %v2393 = vand.u32 %v1801, 4294901760
  %2394 = vmatpush1.msra.mxu0 %v2393
  %2395 = vmatprep.subr.mxu0 0.0
  %v2396 = vand.u32 %v1802, 4294901760
  %2397 = vmatpush1.msra.mxu0 %v2396
  %2398 = vmatprep.subr.mxu0 0.0
  %v2399 = vand.u32 %v1803, 4294901760
  %2400 = vmatpush1.msra.mxu0 %v2399
  %2401 = vmatprep.subr.mxu0 0.0
  %v2402 = vand.u32 %v1804, 4294901760
  %2403 = vmatpush1.msra.mxu0 %v2402
  %2404 = vmatprep.subr.mxu0 0.0
  %v2405 = vand.u32 %v1805, 4294901760
  %2406 = vmatpush1.msra.mxu0 %v2405
  %2407 = vmatprep.subr.mxu0 0.0
  %v2408 = vand.u32 %v1806, 4294901760
  %2409 = vmatpush1.msra.mxu0 %v2408
  %2410 = vmatprep.subr.mxu0 0.0
  %v2411 = vand.u32 %v1807, 4294901760
  %2412 = vmatpush1.msra.mxu0 %v2411
  %2413 = vmatprep.subr.mxu0 0.0
  %v2414 = vand.u32 %v1808, 4294901760
  %2415 = vmatpush1.msra.mxu0 %v2414
  %2416 = vmatprep.subr.mxu0 0.0
  %v2417 = vand.u32 %v1809, 4294901760
  %2418 = vmatpush1.msra.mxu0 %v2417
  %2419 = vmatprep.subr.mxu0 0.0
  %2420 = vmatpush1.msra.mxu0 0.0
  %2421 = vmatprep.subr.mxu0 0.0
  %2422 = vmatpush1.msra.mxu0 0.0
  %2423 = vmatprep.subr.mxu0 0.0
  %2424 = vmatpush1.msra.mxu0 0.0
  %2425 = vmatprep.subr.mxu0 0.0
  %2426 = vmatpush1.msra.mxu0 0.0
  %2427 = vmatprep.subr.mxu0 0.0
  %2428 = vmatpush1.msra.mxu0 0.0
  %2429 = vmatprep.subr.mxu0 0.0
  %2430 = vmatpush1.msra.mxu0 0.0
  %2431 = vmatprep.subr.mxu0 0.0
  %2432 = vmatpush1.msra.mxu0 0.0
  %2433 = vmatprep.subr.mxu0 0.0
  %2434 = vmatpush1.msra.mxu0 0.0
  %2435 = vmatprep.subr.mxu0 0.0
  %2436 = vmatpush1.msra.mxu0 0.0
  %2437 = vmatprep.subr.mxu0 0.0
  %2438 = vmatpush1.msra.mxu0 0.0
  %2439 = vmatprep.subr.mxu0 0.0
  %2440 = vmatpush1.msra.mxu0 0.0
  %2441 = vmatprep.subr.mxu0 0.0
  %2442 = vmatpush1.msra.mxu0 0.0
  %2443 = vmatprep.subr.mxu0 0.0
  %2444 = vmatpush1.msra.mxu0 0.0
  %2445 = vmatprep.subr.mxu0 0.0
  %2446 = vmatpush1.msra.mxu0 0.0
  %2447 = vmatprep.subr.mxu0 0.0
  %2448 = vmatpush1.msra.mxu0 0.0
  %2449 = vmatprep.subr.mxu0 0.0
  %2450 = vmatpush1.msra.mxu0 0.0
  %2451 = vmatprep.mubr.f32.mxu0 0.0
  %v2452 = vand.u32 %v1793, 4294901760
  %2453 = vmatmul.mubr.f32.gmra.mrb[0].mxu0 %v2452
  %v2454 = vpop.f32.mrb[0].mxu0
  %v2455 = vadd.f32 %v2368, %v2454
  %v2456 = vpop.f32.mrb[0].mxu0
  %2457 = vdwg.mxu0
  %v2458 = vsub.f32 0.0, %v2455
  %v2459 = vmul.f32 %v2458, 1.442695
  %v2460 = vpow.pop %v2459
  %v2461 = vadd.f32 %v2460, 1.0
  %v2462 = vrcp.pop %v2461
  %v2463 = vmul.f32 1.0, %v2462
  %2464 = vst [vmem:[%s8] sm:$0x3] %v2463
  // Predicated region
  $region34: #{meta_model_forward.1} parent=0 // pred_check
    _
  $region35: #{meta_model_forward.1} parent=0 // pred_check_branch
    %2466 = sbr.rel (0) target = $region37
  $region36: #{meta_model_forward.1} parent=0 // pred_region
    _
  $region37: #{meta_model_forward.1} parent=0 // pred_fallthru
    _
  // Predicated region
  $region38: #{meta_model_forward.1} parent=0 // pred_check
    _
  $region39: #{meta_model_forward.1} parent=0 // pred_check_branch
    %2468 = sbr.rel (0) target = $region41
  $region40: #{meta_model_forward.1} parent=0 // pred_region
    _
  $region41: #{meta_model_forward.1} parent=0 // pred_fallthru
    _

</llo_original>
